<compile_context>
chip_gen: v6e
topology: v6e:2x2x1
jax: 0.10.0
libtpu: 0.0.40
codegen_flags: <defaults>
</compile_context>

<pallas_src>
import math
import functools

import jax
import jax.numpy as jnp
from jax import lax
from jax.experimental import pallas as pl
from jax.experimental.pallas import tpu as pltpu

_LANE = 128
_SUBLANE = 8


def _round_up(x: int, m: int) -> int:
    return (x + m - 1) // m * m


def _cross_attention_kernel(x_ref, y_ref,
                            wq_ref, bq_ref,
                            wkv_ref, bkv_ref,
                            wo_ref, bo_ref,
                            o_ref,
                            *, n_heads: int, d_head_p: int, lkv: int,
                            compute_dtype):
    f32 = jnp.float32

    # Cast activations to the MXU compute dtype once, at the top.
    x = x_ref[...].astype(compute_dtype)          # (TQ, d_embed_p)
    y = y_ref[...].astype(compute_dtype)          # (Lkv_p, d_cross_p)

    # Projections: bf16 operands, f32 accumulation; bias add in f32.
    # 1/sqrt(d_head) is already folded into wq/bq on the host.
    q = jnp.dot(x, wq_ref[...], preferred_element_type=f32) + bq_ref[...]
    kv = jnp.dot(y, wkv_ref[...], preferred_element_type=f32) + bkv_ref[...]

    hd = n_heads * d_head_p
    qb = q.astype(compute_dtype)                  # (TQ, Hd)
    kb = kv[:, :hd].astype(compute_dtype)         # (Lkv_p, Hd)
    vb = kv[:, hd:].astype(compute_dtype)         # (Lkv_p, Hd)
    wo = wo_ref[...]                              # (Hd, d_embed_p), compute dtype

    tq = q.shape[0]
    lkv_p = y.shape[0]
    need_mask = (lkv_p != lkv)                    # static (trace-time) decision
    if need_mask:
        kv_idx = lax.broadcasted_iota(jnp.int32, (tq, lkv_p), 1)
        kv_valid = kv_idx < lkv

    # scores_h = q_h @ k_h^T without materializing a transpose.
    dn_scores = (((1,), (1,)), ((), ()))

    out = jnp.zeros((tq, o_ref.shape[-1]), f32)
    for h in range(n_heads):                      # small static head count
        sl = slice(h * d_head_p, (h + 1) * d_head_p)   # 128-aligned lane slice

        s = lax.dot_general(qb[:, sl], kb[:, sl], dn_scores,
                            preferred_element_type=f32)        # (TQ, Lkv_p)
        if need_mask:
            s = jnp.where(kv_valid, s, -1e30)

        s = s - jnp.max(s, axis=-1, keepdims=True)
        p = jnp.exp(s)
        p = p * pl.reciprocal(jnp.sum(p, axis=-1, keepdims=True), approx=True)

        pv = jnp.dot(p.astype(compute_dtype), vb[:, sl],
                     preferred_element_type=f32)                # (TQ, d_head_p)
        # Fold the head output straight into the output projection.
        out = out + jnp.dot(pv.astype(compute_dtype), wo[sl, :],
                            preferred_element_type=f32)         # (TQ, d_embed_p)

    o_ref[...] = (out + bo_ref[...]).astype(o_ref.dtype)


def cross_attention(x, y, params, *, n_heads: int, tile_q: int = 512,
                    compute_dtype=jnp.bfloat16):
    """x: (B, Lq, d_embed) f32, y: (B, Lkv, d_cross) f32. Returns (B, Lq, d_embed)."""
    B, Lq, d_embed = x.shape
    _, Lkv, d_cross = y.shape
    assert d_embed % n_heads == 0
    d_head = d_embed // n_heads
    scale = 1.0 / math.sqrt(d_head)

    wq, bq, wk, bk, wv, bv, wo, bo = params

    d_head_p = _round_up(d_head, _LANE)
    d_embed_p = _round_up(d_embed, _LANE)
    d_cross_p = _round_up(d_cross, _LANE)
    Hd = n_heads * d_head_p

    # ---- host-side parameter prep: transpose to (in, out), pad each head to
    # ---- a 128-wide lane block, fuse K/V, fold the 1/sqrt(d_head) scale. ----
    def prep_in_proj(w, b, d_in, d_in_p, s=1.0):
        wt = (w.T * s).reshape(d_in, n_heads, d_head)
        wt = jnp.pad(wt, ((0, d_in_p - d_in), (0, 0), (0, d_head_p - d_head)))
        bb = (b * s).reshape(n_heads, d_head)
        bb = jnp.pad(bb, ((0, 0), (0, d_head_p - d_head)))
        return wt.reshape(d_in_p, Hd), bb.reshape(1, Hd)

    wq_p, bq_p = prep_in_proj(wq, bq, d_embed, d_embed_p, s=scale)
    wk_p, bk_p = prep_in_proj(wk, bk, d_cross, d_cross_p)
    wv_p, bv_p = prep_in_proj(wv, bv, d_cross, d_cross_p)
    wkv_p = jnp.concatenate([wk_p, wv_p], axis=1)        # (d_cross_p, 2*Hd)
    bkv_p = jnp.concatenate([bk_p, bv_p], axis=1)        # (1, 2*Hd)

    wo_t = wo.T.reshape(n_heads, d_head, d_embed)
    wo_t = jnp.pad(wo_t, ((0, 0), (0, d_head_p - d_head), (0, d_embed_p - d_embed)))
    wo_p = wo_t.reshape(Hd, d_embed_p)
    bo_p = jnp.pad(bo, (0, d_embed_p - d_embed)).reshape(1, d_embed_p)

    # Weights in the MXU compute dtype; biases stay f32 (added post-accumulate).
    wq_p = wq_p.astype(compute_dtype)
    wkv_p = wkv_p.astype(compute_dtype)
    wo_p = wo_p.astype(compute_dtype)

    # ---- activation padding & query tiling ----
    TILE_Q = min(_round_up(tile_q, _SUBLANE), _round_up(Lq, _SUBLANE))
    Lq_p = _round_up(Lq, TILE_Q)
    Lkv_p = _round_up(Lkv, _SUBLANE)

    x_p = jnp.pad(x, ((0, 0), (0, Lq_p - Lq), (0, d_embed_p - d_embed)))
    y_p = jnp.pad(y, ((0, 0), (0, Lkv_p - Lkv), (0, d_cross_p - d_cross)))

    kernel = functools.partial(_cross_attention_kernel,
                               n_heads=n_heads, d_head_p=d_head_p,
                               lkv=Lkv, compute_dtype=compute_dtype)

    def full2d(arr):
        return pl.BlockSpec(arr.shape, lambda b, qi: (0, 0))

    out_p = pl.pallas_call(
        kernel,
        out_shape=jax.ShapeDtypeStruct((B, Lq_p, d_embed_p), x.dtype),
        grid_spec=pltpu.PrefetchScalarGridSpec(
            num_scalar_prefetch=0,
            grid=(B, Lq_p // TILE_Q),
            in_specs=[
                pl.BlockSpec((None, TILE_Q, d_embed_p), lambda b, qi: (b, qi, 0)),  # x
                pl.BlockSpec((None, Lkv_p, d_cross_p), lambda b, qi: (b, 0, 0)),    # y
                full2d(wq_p), full2d(bq_p),
                full2d(wkv_p), full2d(bkv_p),
                full2d(wo_p), full2d(bo_p),
            ],
            out_specs=pl.BlockSpec((None, TILE_Q, d_embed_p),
                                   lambda b, qi: (b, qi, 0)),
        ),
        compiler_params=pltpu.CompilerParams(
            dimension_semantics=("parallel", "parallel"),
            vmem_limit_bytes=48 * 1024 * 1024,
        ),
    )(x_p, y_p, wq_p, bq_p, wkv_p, bkv_p, wo_p, bo_p)

    return out_p[:, :Lq, :d_embed]


def _reference(x, y, params, n_heads):
    wq, bq, wk, bk, wv, bv, wo, bo = params
    B, Lq, d_embed = x.shape
    d_head = d_embed // n_heads
    q = x @ wq.T + bq
    k = y @ wk.T + bk
    v = y @ wv.T + bv

    def split(t):
        Bn, L, _ = t.shape
        return t.reshape(Bn, L, n_heads, d_head).transpose(0, 2, 1, 3)

    q, k, v = split(q), split(k), split(v)
    w = (q @ k.transpose(0, 1, 3, 2)) / math.sqrt(d_head)
    w = jax.nn.softmax(w, axis=-1)
    o = (w @ v).transpose(0, 2, 1, 3).reshape(B, Lq, d_embed)
    return o @ wo.T + bo


def _make_params(key, n_heads, d_embed, d_cross):
    keys = jax.random.split(key, 8)

    def init_linear(kw, kb, out_f, in_f):
        bound = 1.0 / math.sqrt(in_f)
        w = jax.random.uniform(kw, (out_f, in_f), jnp.float32, -bound, bound)
        b = jax.random.uniform(kb, (out_f,), jnp.float32, -bound, bound)
        return w, b

    wq, bq = init_linear(keys[0], keys[1], d_embed, d_embed)
    wk, bk = init_linear(keys[2], keys[3], d_embed, d_cross)
    wv, bv = init_linear(keys[4], keys[5], d_embed, d_cross)
    wo, bo = init_linear(keys[6], keys[7], d_embed, d_embed)
    return (wq, bq, wk, bk, wv, bv, wo, bo)


def _check(key, B, Lq, Lkv, n_heads, d_embed, d_cross):
    kx, ky, kp = jax.random.split(key, 3)
    x = jax.random.normal(kx, (B, Lq, d_embed), dtype=jnp.float32)
    y = jax.random.normal(ky, (B, Lkv, d_cross), dtype=jnp.float32)
    params = _make_params(kp, n_heads, d_embed, d_cross)

    out = cross_attention(x, y, params, n_heads=n_heads)
    out = jax.block_until_ready(out)
    ref = _reference(x, y, params, n_heads)

    assert out.shape == (B, Lq, d_embed)
    # bf16 MXU operands (f32 accumulation) + approx reciprocal -> loosened tol.
    assert jnp.allclose(out, ref, atol=5e-2, rtol=5e-2), (
        f"max abs err = {jnp.max(jnp.abs(out - ref))}")


if __name__ == "__main__":
    key = jax.random.PRNGKey(0)
    k0, k1 = jax.random.split(key)

    # Primary small config (matches the module's intended shapes).
    _check(k0, B=2, Lq=8, Lkv=8, n_heads=4, d_embed=32, d_cross=16)
    # Ragged config: exercises Lq / Lkv padding + key-padding mask path.
    _check(k1, B=2, Lq=10, Lkv=7, n_heads=4, d_embed=32, d_cross=16)

    print("KERNEL_OK")
</pallas_src>

<mosaic_0001>
module attributes {stable_mosaic.version = 11 : i64} {
  func.func @_cross_attention_kernel(%arg0: i32, %arg1: i32, %arg2: memref<1x8x128xf32, #tpu.memory_space<vmem>>, %arg3: memref<1x8x128xf32, #tpu.memory_space<vmem>>, %arg4: memref<128x512xbf16, #tpu.memory_space<vmem>>, %arg5: memref<1x512xf32, #tpu.memory_space<vmem>>, %arg6: memref<128x1024xbf16, #tpu.memory_space<vmem>>, %arg7: memref<1x1024xf32, #tpu.memory_space<vmem>>, %arg8: memref<512x128xbf16, #tpu.memory_space<vmem>>, %arg9: memref<1x128xf32, #tpu.memory_space<vmem>>, %arg10: memref<1x8x128xf32, #tpu.memory_space<vmem>>) attributes {dimension_semantics = [#tpu.dimension_semantics<parallel>, #tpu.dimension_semantics<parallel>], iteration_bounds = array<i64: 2, 1>, scalar_prefetch = 0 : i64, scratch_operands = 0 : i64, tpu.core_type = #tpu.core_type<tc>, window_params = [{transform_indices = @transform_0, window_bounds = array<i64: 1, 8, 128>}, {transform_indices = @transform_1, window_bounds = array<i64: 1, 8, 128>}, {pipeline_mode = #tpu.pipeline_mode<synchronous>, transform_indices = @transform_2, window_bounds = array<i64: 128, 512>}, {pipeline_mode = #tpu.pipeline_mode<synchronous>, transform_indices = @transform_3, window_bounds = array<i64: 1, 512>}, {pipeline_mode = #tpu.pipeline_mode<synchronous>, transform_indices = @transform_4, window_bounds = array<i64: 128, 1024>}, {pipeline_mode = #tpu.pipeline_mode<synchronous>, transform_indices = @transform_5, window_bounds = array<i64: 1, 1024>}, {pipeline_mode = #tpu.pipeline_mode<synchronous>, transform_indices = @transform_6, window_bounds = array<i64: 512, 128>}, {pipeline_mode = #tpu.pipeline_mode<synchronous>, transform_indices = @transform_7, window_bounds = array<i64: 1, 128>}, {transform_indices = @transform_8, window_bounds = array<i64: 1, 8, 128>}]} {
    %c0 = arith.constant 0 : index
    %c0_0 = arith.constant 0 : index
    %c0_1 = arith.constant 0 : index
    %0 = vector.load %arg2[%c0, %c0_0, %c0_1] : memref<1x8x128xf32, #tpu.memory_space<vmem>>, vector<1x8x128xf32>
    %1 = vector.shape_cast %0 : vector<1x8x128xf32> to vector<8x128xf32>
    %2 = arith.truncf %1 : vector<8x128xf32> to vector<8x128xbf16>
    %c0_2 = arith.constant 0 : index
    %c0_3 = arith.constant 0 : index
    %c0_4 = arith.constant 0 : index
    %3 = vector.load %arg3[%c0_2, %c0_3, %c0_4] : memref<1x8x128xf32, #tpu.memory_space<vmem>>, vector<1x8x128xf32>
    %4 = vector.shape_cast %3 : vector<1x8x128xf32> to vector<8x128xf32>
    %5 = arith.truncf %4 : vector<8x128xf32> to vector<8x128xbf16>
    %c0_5 = arith.constant 0 : index
    %c0_6 = arith.constant 0 : index
    %6 = vector.load %arg4[%c0_5, %c0_6] : memref<128x512xbf16, #tpu.memory_space<vmem>>, vector<128x512xbf16>
    %cst = arith.constant dense<0.000000e+00> : vector<8x512xf32>
    %7 = tpu.matmul %2, %6, %cst {dimension_numbers = #tpu.dot_dimension_numbers<[1], [0], [0], [1], [0, 0, 1, 1], [], []>} : vector<8x128xbf16>, vector<128x512xbf16>, vector<8x512xf32> -> vector<8x512xf32>
    %c0_7 = arith.constant 0 : index
    %c0_8 = arith.constant 0 : index
    %8 = vector.load %arg5[%c0_7, %c0_8] : memref<1x512xf32, #tpu.memory_space<vmem>>, vector<1x512xf32>
    %9 = vector.broadcast %8 : vector<1x512xf32> to vector<8x512xf32>
    %10 = arith.addf %7, %9 : vector<8x512xf32>
    %c0_9 = arith.constant 0 : index
    %c0_10 = arith.constant 0 : index
    %11 = vector.load %arg6[%c0_9, %c0_10] : memref<128x1024xbf16, #tpu.memory_space<vmem>>, vector<128x1024xbf16>
    %cst_11 = arith.constant dense<0.000000e+00> : vector<8x1024xf32>
    %12 = tpu.matmul %5, %11, %cst_11 {dimension_numbers = #tpu.dot_dimension_numbers<[1], [0], [0], [1], [0, 0, 1, 1], [], []>} : vector<8x128xbf16>, vector<128x1024xbf16>, vector<8x1024xf32> -> vector<8x1024xf32>
    %c0_12 = arith.constant 0 : index
    %c0_13 = arith.constant 0 : index
    %13 = vector.load %arg7[%c0_12, %c0_13] : memref<1x1024xf32, #tpu.memory_space<vmem>>, vector<1x1024xf32>
    %14 = vector.broadcast %13 : vector<1x1024xf32> to vector<8x1024xf32>
    %15 = arith.addf %12, %14 : vector<8x1024xf32>
    %16 = arith.truncf %10 : vector<8x512xf32> to vector<8x512xbf16>
    %17 = vector.extract_strided_slice %15 {offsets = [0, 0], sizes = [8, 512], strides = [1, 1]} : vector<8x1024xf32> to vector<8x512xf32>
    %18 = arith.truncf %17 : vector<8x512xf32> to vector<8x512xbf16>
    %19 = vector.extract_strided_slice %15 {offsets = [0, 512], sizes = [8, 512], strides = [1, 1]} : vector<8x1024xf32> to vector<8x512xf32>
    %20 = arith.truncf %19 : vector<8x512xf32> to vector<8x512xbf16>
    %c0_14 = arith.constant 0 : index
    %c0_15 = arith.constant 0 : index
    %21 = vector.load %arg8[%c0_14, %c0_15] : memref<512x128xbf16, #tpu.memory_space<vmem>>, vector<512x128xbf16>
    %cst_16 = arith.constant 0.000000e+00 : f32
    %22 = vector.broadcast %cst_16 : f32 to vector<8x128xf32>
    %23 = vector.extract_strided_slice %16 {offsets = [0, 0], sizes = [8, 128], strides = [1, 1]} : vector<8x512xbf16> to vector<8x128xbf16>
    %24 = vector.extract_strided_slice %18 {offsets = [0, 0], sizes = [8, 128], strides = [1, 1]} : vector<8x512xbf16> to vector<8x128xbf16>
    %cst_17 = arith.constant dense<0.000000e+00> : vector<8x8xf32>
    %25 = tpu.matmul %23, %24, %cst_17 {dimension_numbers = #tpu.dot_dimension_numbers<[1], [1], [0], [0], [0, 0, 1, 0], [], []>} : vector<8x128xbf16>, vector<8x128xbf16>, vector<8x8xf32> -> vector<8x8xf32>
    %cst_18 = arith.constant dense<0xFF800000> : vector<8xf32>
    %26 = vector.multi_reduction <maximumf>, %25, %cst_18 [1] : vector<8x8xf32> to vector<8xf32>
    %27 = vector.shape_cast %26 : vector<8xf32> to vector<8x1xf32>
    %28 = vector.broadcast %27 : vector<8x1xf32> to vector<8x8xf32>
    %29 = arith.subf %25, %28 : vector<8x8xf32>
    %30 = math.exp %29 : vector<8x8xf32>
    %cst_19 = arith.constant dense<0.000000e+00> : vector<8xf32>
    %31 = vector.multi_reduction <add>, %30, %cst_19 [1] : vector<8x8xf32> to vector<8xf32>
    %32 = vector.shape_cast %31 : vector<8xf32> to vector<8x1xf32>
    %33 = tpu.reciprocal %32 {approx = true} : vector<8x1xf32> -> vector<8x1xf32>
    %34 = vector.broadcast %33 : vector<8x1xf32> to vector<8x8xf32>
    %35 = arith.mulf %30, %34 : vector<8x8xf32>
    %36 = arith.truncf %35 : vector<8x8xf32> to vector<8x8xbf16>
    %37 = vector.extract_strided_slice %20 {offsets = [0, 0], sizes = [8, 128], strides = [1, 1]} : vector<8x512xbf16> to vector<8x128xbf16>
    %cst_20 = arith.constant dense<0.000000e+00> : vector<8x128xf32>
    %38 = tpu.matmul %36, %37, %cst_20 {dimension_numbers = #tpu.dot_dimension_numbers<[1], [0], [0], [1], [0, 0, 1, 1], [], []>} : vector<8x8xbf16>, vector<8x128xbf16>, vector<8x128xf32> -> vector<8x128xf32>
    %39 = arith.truncf %38 : vector<8x128xf32> to vector<8x128xbf16>
    %40 = vector.extract_strided_slice %21 {offsets = [0, 0], sizes = [128, 128], strides = [1, 1]} : vector<512x128xbf16> to vector<128x128xbf16>
    %cst_21 = arith.constant dense<0.000000e+00> : vector<8x128xf32>
    %41 = tpu.matmul %39, %40, %cst_21 {dimension_numbers = #tpu.dot_dimension_numbers<[1], [0], [0], [1], [0, 0, 1, 1], [], []>} : vector<8x128xbf16>, vector<128x128xbf16>, vector<8x128xf32> -> vector<8x128xf32>
    %42 = arith.addf %22, %41 : vector<8x128xf32>
    %43 = vector.extract_strided_slice %16 {offsets = [0, 128], sizes = [8, 128], strides = [1, 1]} : vector<8x512xbf16> to vector<8x128xbf16>
    %44 = vector.extract_strided_slice %18 {offsets = [0, 128], sizes = [8, 128], strides = [1, 1]} : vector<8x512xbf16> to vector<8x128xbf16>
    %cst_22 = arith.constant dense<0.000000e+00> : vector<8x8xf32>
    %45 = tpu.matmul %43, %44, %cst_22 {dimension_numbers = #tpu.dot_dimension_numbers<[1], [1], [0], [0], [0, 0, 1, 0], [], []>} : vector<8x128xbf16>, vector<8x128xbf16>, vector<8x8xf32> -> vector<8x8xf32>
    %cst_23 = arith.constant dense<0xFF800000> : vector<8xf32>
    %46 = vector.multi_reduction <maximumf>, %45, %cst_23 [1] : vector<8x8xf32> to vector<8xf32>
    %47 = vector.shape_cast %46 : vector<8xf32> to vector<8x1xf32>
    %48 = vector.broadcast %47 : vector<8x1xf32> to vector<8x8xf32>
    %49 = arith.subf %45, %48 : vector<8x8xf32>
    %50 = math.exp %49 : vector<8x8xf32>
    %cst_24 = arith.constant dense<0.000000e+00> : vector<8xf32>
    %51 = vector.multi_reduction <add>, %50, %cst_24 [1] : vector<8x8xf32> to vector<8xf32>
    %52 = vector.shape_cast %51 : vector<8xf32> to vector<8x1xf32>
    %53 = tpu.reciprocal %52 {approx = true} : vector<8x1xf32> -> vector<8x1xf32>
    %54 = vector.broadcast %53 : vector<8x1xf32> to vector<8x8xf32>
    %55 = arith.mulf %50, %54 : vector<8x8xf32>
    %56 = arith.truncf %55 : vector<8x8xf32> to vector<8x8xbf16>
    %57 = vector.extract_strided_slice %20 {offsets = [0, 128], sizes = [8, 128], strides = [1, 1]} : vector<8x512xbf16> to vector<8x128xbf16>
    %cst_25 = arith.constant dense<0.000000e+00> : vector<8x128xf32>
    %58 = tpu.matmul %56, %57, %cst_25 {dimension_numbers = #tpu.dot_dimension_numbers<[1], [0], [0], [1], [0, 0, 1, 1], [], []>} : vector<8x8xbf16>, vector<8x128xbf16>, vector<8x128xf32> -> vector<8x128xf32>
    %59 = arith.truncf %58 : vector<8x128xf32> to vector<8x128xbf16>
    %60 = vector.extract_strided_slice %21 {offsets = [128, 0], sizes = [128, 128], strides = [1, 1]} : vector<512x128xbf16> to vector<128x128xbf16>
    %cst_26 = arith.constant dense<0.000000e+00> : vector<8x128xf32>
    %61 = tpu.matmul %59, %60, %cst_26 {dimension_numbers = #tpu.dot_dimension_numbers<[1], [0], [0], [1], [0, 0, 1, 1], [], []>} : vector<8x128xbf16>, vector<128x128xbf16>, vector<8x128xf32> -> vector<8x128xf32>
    %62 = arith.addf %42, %61 : vector<8x128xf32>
    %63 = vector.extract_strided_slice %16 {offsets = [0, 256], sizes = [8, 128], strides = [1, 1]} : vector<8x512xbf16> to vector<8x128xbf16>
    %64 = vector.extract_strided_slice %18 {offsets = [0, 256], sizes = [8, 128], strides = [1, 1]} : vector<8x512xbf16> to vector<8x128xbf16>
    %cst_27 = arith.constant dense<0.000000e+00> : vector<8x8xf32>
    %65 = tpu.matmul %63, %64, %cst_27 {dimension_numbers = #tpu.dot_dimension_numbers<[1], [1], [0], [0], [0, 0, 1, 0], [], []>} : vector<8x128xbf16>, vector<8x128xbf16>, vector<8x8xf32> -> vector<8x8xf32>
    %cst_28 = arith.constant dense<0xFF800000> : vector<8xf32>
    %66 = vector.multi_reduction <maximumf>, %65, %cst_28 [1] : vector<8x8xf32> to vector<8xf32>
    %67 = vector.shape_cast %66 : vector<8xf32> to vector<8x1xf32>
    %68 = vector.broadcast %67 : vector<8x1xf32> to vector<8x8xf32>
    %69 = arith.subf %65, %68 : vector<8x8xf32>
    %70 = math.exp %69 : vector<8x8xf32>
    %cst_29 = arith.constant dense<0.000000e+00> : vector<8xf32>
    %71 = vector.multi_reduction <add>, %70, %cst_29 [1] : vector<8x8xf32> to vector<8xf32>
    %72 = vector.shape_cast %71 : vector<8xf32> to vector<8x1xf32>
    %73 = tpu.reciprocal %72 {approx = true} : vector<8x1xf32> -> vector<8x1xf32>
    %74 = vector.broadcast %73 : vector<8x1xf32> to vector<8x8xf32>
    %75 = arith.mulf %70, %74 : vector<8x8xf32>
    %76 = arith.truncf %75 : vector<8x8xf32> to vector<8x8xbf16>
    %77 = vector.extract_strided_slice %20 {offsets = [0, 256], sizes = [8, 128], strides = [1, 1]} : vector<8x512xbf16> to vector<8x128xbf16>
    %cst_30 = arith.constant dense<0.000000e+00> : vector<8x128xf32>
    %78 = tpu.matmul %76, %77, %cst_30 {dimension_numbers = #tpu.dot_dimension_numbers<[1], [0], [0], [1], [0, 0, 1, 1], [], []>} : vector<8x8xbf16>, vector<8x128xbf16>, vector<8x128xf32> -> vector<8x128xf32>
    %79 = arith.truncf %78 : vector<8x128xf32> to vector<8x128xbf16>
    %80 = vector.extract_strided_slice %21 {offsets = [256, 0], sizes = [128, 128], strides = [1, 1]} : vector<512x128xbf16> to vector<128x128xbf16>
    %cst_31 = arith.constant dense<0.000000e+00> : vector<8x128xf32>
    %81 = tpu.matmul %79, %80, %cst_31 {dimension_numbers = #tpu.dot_dimension_numbers<[1], [0], [0], [1], [0, 0, 1, 1], [], []>} : vector<8x128xbf16>, vector<128x128xbf16>, vector<8x128xf32> -> vector<8x128xf32>
    %82 = arith.addf %62, %81 : vector<8x128xf32>
    %83 = vector.extract_strided_slice %16 {offsets = [0, 384], sizes = [8, 128], strides = [1, 1]} : vector<8x512xbf16> to vector<8x128xbf16>
    %84 = vector.extract_strided_slice %18 {offsets = [0, 384], sizes = [8, 128], strides = [1, 1]} : vector<8x512xbf16> to vector<8x128xbf16>
    %cst_32 = arith.constant dense<0.000000e+00> : vector<8x8xf32>
    %85 = tpu.matmul %83, %84, %cst_32 {dimension_numbers = #tpu.dot_dimension_numbers<[1], [1], [0], [0], [0, 0, 1, 0], [], []>} : vector<8x128xbf16>, vector<8x128xbf16>, vector<8x8xf32> -> vector<8x8xf32>
    %cst_33 = arith.constant dense<0xFF800000> : vector<8xf32>
    %86 = vector.multi_reduction <maximumf>, %85, %cst_33 [1] : vector<8x8xf32> to vector<8xf32>
    %87 = vector.shape_cast %86 : vector<8xf32> to vector<8x1xf32>
    %88 = vector.broadcast %87 : vector<8x1xf32> to vector<8x8xf32>
    %89 = arith.subf %85, %88 : vector<8x8xf32>
    %90 = math.exp %89 : vector<8x8xf32>
    %cst_34 = arith.constant dense<0.000000e+00> : vector<8xf32>
    %91 = vector.multi_reduction <add>, %90, %cst_34 [1] : vector<8x8xf32> to vector<8xf32>
    %92 = vector.shape_cast %91 : vector<8xf32> to vector<8x1xf32>
    %93 = tpu.reciprocal %92 {approx = true} : vector<8x1xf32> -> vector<8x1xf32>
    %94 = vector.broadcast %93 : vector<8x1xf32> to vector<8x8xf32>
    %95 = arith.mulf %90, %94 : vector<8x8xf32>
    %96 = arith.truncf %95 : vector<8x8xf32> to vector<8x8xbf16>
    %97 = vector.extract_strided_slice %20 {offsets = [0, 384], sizes = [8, 128], strides = [1, 1]} : vector<8x512xbf16> to vector<8x128xbf16>
    %cst_35 = arith.constant dense<0.000000e+00> : vector<8x128xf32>
    %98 = tpu.matmul %96, %97, %cst_35 {dimension_numbers = #tpu.dot_dimension_numbers<[1], [0], [0], [1], [0, 0, 1, 1], [], []>} : vector<8x8xbf16>, vector<8x128xbf16>, vector<8x128xf32> -> vector<8x128xf32>
    %99 = arith.truncf %98 : vector<8x128xf32> to vector<8x128xbf16>
    %100 = vector.extract_strided_slice %21 {offsets = [384, 0], sizes = [128, 128], strides = [1, 1]} : vector<512x128xbf16> to vector<128x128xbf16>
    %cst_36 = arith.constant dense<0.000000e+00> : vector<8x128xf32>
    %101 = tpu.matmul %99, %100, %cst_36 {dimension_numbers = #tpu.dot_dimension_numbers<[1], [0], [0], [1], [0, 0, 1, 1], [], []>} : vector<8x128xbf16>, vector<128x128xbf16>, vector<8x128xf32> -> vector<8x128xf32>
    %102 = arith.addf %82, %101 : vector<8x128xf32>
    %c0_37 = arith.constant 0 : index
    %c0_38 = arith.constant 0 : index
    %103 = vector.load %arg9[%c0_37, %c0_38] : memref<1x128xf32, #tpu.memory_space<vmem>>, vector<1x128xf32>
    %104 = vector.broadcast %103 : vector<1x128xf32> to vector<8x128xf32>
    %105 = arith.addf %102, %104 : vector<8x128xf32>
    %c0_39 = arith.constant 0 : index
    %c0_40 = arith.constant 0 : index
    %c0_41 = arith.constant 0 : index
    %106 = vector.load %arg10[%c0_39, %c0_40, %c0_41] : memref<1x8x128xf32, #tpu.memory_space<vmem>>, vector<1x8x128xf32>
    %107 = vector.shape_cast %106 : vector<1x8x128xf32> to vector<8x128xf32>
    %108 = vector.shape_cast %105 : vector<8x128xf32> to vector<1x8x128xf32>
    tpu.vector_store %arg10[%c0_39, %c0_40, %c0_41], %108 {strides = array<i32>} : memref<1x8x128xf32, #tpu.memory_space<vmem>>, vector<1x8x128xf32>,
    return
  }
  func.func @transform_0(%arg0: i32, %arg1: i32) -> (i32, i32, i32) {
    %c0_i32 = arith.constant 0 : i32
    %c0_i32_0 = arith.constant 0 : i32
    return %arg0, %arg1, %c0_i32 : i32, i32, i32
  }
  func.func @transform_1(%arg0: i32, %arg1: i32) -> (i32, i32, i32) {
    %c0_i32 = arith.constant 0 : i32
    %c0_i32_0 = arith.constant 0 : i32
    %c0_i32_1 = arith.constant 0 : i32
    return %arg0, %c0_i32, %c0_i32_0 : i32, i32, i32
  }
  func.func @transform_2(%arg0: i32, %arg1: i32) -> (i32, i32) {
    %c0_i32 = arith.constant 0 : i32
    %c0_i32_0 = arith.constant 0 : i32
    %c0_i32_1 = arith.constant 0 : i32
    return %c0_i32, %c0_i32_0 : i32, i32
  }
  func.func @transform_3(%arg0: i32, %arg1: i32) -> (i32, i32) {
    %c0_i32 = arith.constant 0 : i32
    %c0_i32_0 = arith.constant 0 : i32
    %c0_i32_1 = arith.constant 0 : i32
    return %c0_i32, %c0_i32_0 : i32, i32
  }
  func.func @transform_4(%arg0: i32, %arg1: i32) -> (i32, i32) {
    %c0_i32 = arith.constant 0 : i32
    %c0_i32_0 = arith.constant 0 : i32
    %c0_i32_1 = arith.constant 0 : i32
    return %c0_i32, %c0_i32_0 : i32, i32
  }
  func.func @transform_5(%arg0: i32, %arg1: i32) -> (i32, i32) {
    %c0_i32 = arith.constant 0 : i32
    %c0_i32_0 = arith.constant 0 : i32
    %c0_i32_1 = arith.constant 0 : i32
    return %c0_i32, %c0_i32_0 : i32, i32
  }
  func.func @transform_6(%arg0: i32, %arg1: i32) -> (i32, i32) {
    %c0_i32 = arith.constant 0 : i32
    %c0_i32_0 = arith.constant 0 : i32
    %c0_i32_1 = arith.constant 0 : i32
    return %c0_i32, %c0_i32_0 : i32, i32
  }
  func.func @transform_7(%arg0: i32, %arg1: i32) -> (i32, i32) {
    %c0_i32 = arith.constant 0 : i32
    %c0_i32_0 = arith.constant 0 : i32
    %c0_i32_1 = arith.constant 0 : i32
    return %c0_i32, %c0_i32_0 : i32, i32
  }
  func.func @transform_8(%arg0: i32, %arg1: i32) -> (i32, i32, i32) {
    %c0_i32 = arith.constant 0 : i32
    %c0_i32_0 = arith.constant 0 : i32
    return %arg0, %arg1, %c0_i32 : i32, i32, i32
  }
}

</mosaic_0001>

<llo_original>
// kernel: tpu_custom_call.1
$region0: #{tpu_custom_call.1}
  #allocation0 [shape = 'u32[]', space=smem, size = 0x4, offset = 0x4, fixed_abs, tag = 'smem constant byte address 0x4 - core index']
  #allocation1 [shape = 'u32[144,128]{1,0:T(1,128)}', space=vmem, size = 0x12000, scoped, tag = 'internal scratch']
  %s0 = inlined_call_operand.hbm [shape: f32[2,8,128], index: 0, kind: input, shape index: {}]
  %s1 = inlined_call_operand.hbm [shape: f32[2,8,128], index: 1, kind: input, shape index: {}]
  %s2 = inlined_call_operand.hbm [shape: bf16[128,512], index: 2, kind: input, shape index: {}]
  %s3 = inlined_call_operand.hbm [shape: f32[1,512], index: 3, kind: input, shape index: {}]
  %s4 = inlined_call_operand.hbm [shape: bf16[128,1024], index: 4, kind: input, shape index: {}]
  %s5 = inlined_call_operand.vmem [shape: f32[1,1024], index: 5, kind: input, shape index: {}]
  %s6 = inlined_call_operand.hbm [shape: bf16[512,128], index: 6, kind: input, shape index: {}]
  %s7 = inlined_call_operand.vmem [shape: f32[1,128], index: 7, kind: input, shape index: {}]
  %s8 = inlined_call_operand.hbm [shape: f32[2,8,128], index: 8, kind: output, shape index: {}]
  %s9 = sld [smem:[#allocation0]]
  $region89: #{tpu_custom_call.1} parent=0
    _
  %s11 = ssub.s32 1, %s9
  %s12 = scalar_select 0, %s11, %s9
  $region1: #{tpu_custom_call.1} parent=0
    #allocation2 [shape = 'u8[8192]{0}', space=vmem, size = 0x2000, scoped, tag = 'input window, operand 0']
    #allocation3 [shape = 's32[2]{0}', space=sflag, size = 0x8, scoped, tag = 'scoped memory for tpu_custom_call.1']
    #allocation4 [shape = 's32[2]{0}', space=sflag, size = 0x8, scoped, tag = 'scoped memory for tpu_custom_call.1']
    #allocation5 [shape = 'u8[8192]{0}', space=vmem, size = 0x2000, scoped, tag = 'input window, operand 1']
    #allocation6 [shape = 's32[2]{0}', space=sflag, size = 0x8, scoped, tag = 'scoped memory for tpu_custom_call.1']
    #allocation7 [shape = 'u8[131072]{0}', space=vmem, size = 0x20000, scoped, tag = 'input window, operand 2, single buffered']
    #allocation8 [shape = 'u8[2048]{0}', space=vmem, size = 0x800, scoped, tag = 'input window, operand 3, single buffered']
    #allocation9 [shape = 's32[1]{0}', space=sflag, size = 0x4, scoped, tag = 'scoped memory for tpu_custom_call.1']
    #allocation10 [shape = 'u8[262144]{0}', space=vmem, size = 0x40000, scoped, tag = 'input window, operand 4, single buffered']
    #allocation11 [shape = 'u8[131072]{0}', space=vmem, size = 0x20000, scoped, tag = 'input window, operand 6, single buffered']
    #allocation12 [shape = 's32[1]{0}', space=sflag, size = 0x4, scoped, tag = 'scoped memory for tpu_custom_call.1']
    #allocation13 [shape = 'u8[8192]{0}', space=vmem, size = 0x2000, scoped, tag = 'output window, operand 0']
    %13 = vsyncpa [#allocation3], 0
    %s14 = scalar_lea.sflag [#allocation3], 1
    %15 = vsyncpa %s14, 0
    %16 = vsyncpa [#allocation6], 0
    %s17 = scalar_lea.sflag [#allocation6], 1
    %18 = vsyncpa %s17, 0
    %19 = vsyncpa [#allocation9], 0
    %20 = vsyncpa [#allocation12], 0
    %21 = vsyncpa [#allocation4], 0
    %s22 = scalar_lea.sflag [#allocation4], 1
    %23 = vsyncpa %s22, 0
    loop: start=0, step=1, limit=4
    $region2: #{tpu_custom_call.1} parent=1 // loop_pre_header
      _
    $region3: #{tpu_custom_call.1} parent=1 // loop_header
      %s25 = sphi 0, %s29
      %p26 = scmp.ge.s32.totalorder %s25, 4
      %s32 = sphi 0, %s44
      %s33 = sphi 0, %s40
      %s34 = sphi 0, %s32
      %s35 = sphi 0, %s33
      %s36 = sphi 0, %s34
      %s37 = sphi 0, %s35
      %s49 = sphi 0, %s51
      %s52 = sphi 0, %s49
      %s53 = sphi 0, %s52
      %s69 = sphi 0, %s53
      %s75 = sphi 0, %s77
      %s78 = sphi 0, %s75
      %s79 = sphi 0, %s78
      %s95 = sphi 0, %s79
      %s99 = sphi 0, %s99
      %s101 = sphi 0, %s99
      %s102 = sphi 0, %s101
      %s116 = sphi 0, %s102
      %s120 = sphi 0, %s120
      %s122 = sphi 0, %s120
      %s123 = sphi 0, %s122
      %s137 = sphi 0, %s123
      %s141 = sphi 0, %s141
      %s143 = sphi 0, %s141
      %s144 = sphi 0, %s143
      %s158 = sphi 0, %s144
      %s162 = sphi 0, %s162
      %s164 = sphi 0, %s162
      %s165 = sphi 0, %s164
      %s179 = sphi 0, %s165
      %s183 = sphi 0, %s183
      %s185 = sphi 0, %s183
      %s186 = sphi 0, %s185
      %s200 = sphi 0, %s186
      %s204 = sphi 0, %s204
      %s206 = sphi 0, %s204
      %s207 = sphi 0, %s206
      %s221 = sphi 0, %s207
      %s229 = sphi 0, %s231
      %s232 = sphi 0, %s229
      %s233 = sphi 0, %s232
      %s249 = sphi 0, %s233
    $region4: #{tpu_custom_call.1} parent=1 // loop_header_branch
      %28 = sbr.rel (%p26) target = $region8
    $region5: #{tpu_custom_call.1} parent=1 // loop_body
      %s30 = ssub.s32 %s25, 1
      %s31 = ssub.s32 %s25, 2
      %s38 = sadd.s32 1, %s33
      %p39 = scmp.ge.s32.totalorder %s38, 1
      %s40 = scalar_select %p39, 0, %s38
      %s41 = sadd.s32 1, %s32
      %s42 = scalar_select %p39, %s41, %s32
      %p43 = scmp.ge.s32.totalorder %s42, 2
      %s44 = scalar_select %p43, 0, %s42
      %s45 = ssub.s32 %s32, %s44
      %s46 = ssub.s32 %s33, %s40
      %s47 = sor.u32 %s45, %s46
      %p48 = scmp.eq.s32.totalorder %s47, 0
      %s50 = sadd.s32 %s49, 1
      %s51 = scalar_select %p48, %s49, %s50
      %p54 = pneg %p48
      %p55 = scmp.eq.s32.totalorder %s25, 1
      %p56 = por %p54, %p55
      %p57 = scmp.ne.s32.totalorder %s49, %s52
      %p58 = scmp.eq.s32.totalorder %s25, 0
      %p59 = por %p57, %p58
      %p60 = scmp.ne.s32.totalorder %s49, %s52
      %p61 = scmp.eq.s32.totalorder %s30, 1
      %p62 = por %p60, %p61
      %p63 = scmp.ne.s32.totalorder %s52, %s53
      %p64 = scmp.eq.s32.totalorder %s30, 0
      %p65 = por %p63, %p64
      %p66 = scmp.ne.s32.totalorder %s52, %s53
      %p67 = scmp.eq.s32.totalorder %s31, 1
      %p68 = por %p66, %p67
      %p70 = scmp.ne.s32.totalorder %s53, %s69
      %p71 = scmp.eq.s32.totalorder %s31, 0
      %p72 = por %p70, %p71
      %s73 = ssub.s32 %s32, %s44
      %p74 = scmp.eq.s32.totalorder %s73, 0
      %s76 = sadd.s32 %s75, 1
      %s77 = scalar_select %p74, %s75, %s76
      %p80 = pneg %p74
      %p81 = scmp.eq.s32.totalorder %s25, 1
      %p82 = por %p80, %p81
      %p83 = scmp.ne.s32.totalorder %s75, %s78
      %p84 = scmp.eq.s32.totalorder %s25, 0
      %p85 = por %p83, %p84
      %p86 = scmp.ne.s32.totalorder %s75, %s78
      %p87 = scmp.eq.s32.totalorder %s30, 1
      %p88 = por %p86, %p87
      %p89 = scmp.ne.s32.totalorder %s78, %s79
      %p90 = scmp.eq.s32.totalorder %s30, 0
      %p91 = por %p89, %p90
      %p92 = scmp.ne.s32.totalorder %s78, %s79
      %p93 = scmp.eq.s32.totalorder %s31, 1
      %p94 = por %p92, %p93
      %p96 = scmp.ne.s32.totalorder %s79, %s95
      %p97 = scmp.eq.s32.totalorder %s31, 0
      %p98 = por %p96, %p97
      %s100 = sadd.s32 %s99, 1
      %p103 = scmp.eq.s32.totalorder %s25, 1
      %p104 = scmp.ne.s32.totalorder %s99, %s101
      %p105 = scmp.eq.s32.totalorder %s25, 0
      %p106 = por %p104, %p105
      %p107 = scmp.ne.s32.totalorder %s99, %s101
      %p108 = scmp.eq.s32.totalorder %s30, 1
      %p109 = por %p107, %p108
      %p110 = scmp.ne.s32.totalorder %s101, %s102
      %p111 = scmp.eq.s32.totalorder %s30, 0
      %p112 = por %p110, %p111
      %p113 = scmp.ne.s32.totalorder %s101, %s102
      %p114 = scmp.eq.s32.totalorder %s31, 1
      %p115 = por %p113, %p114
      %p117 = scmp.ne.s32.totalorder %s102, %s116
      %p118 = scmp.eq.s32.totalorder %s31, 0
      %p119 = por %p117, %p118
      %s121 = sadd.s32 %s120, 1
      %p124 = scmp.eq.s32.totalorder %s25, 1
      %p125 = scmp.ne.s32.totalorder %s120, %s122
      %p126 = scmp.eq.s32.totalorder %s25, 0
      %p127 = por %p125, %p126
      %p128 = scmp.ne.s32.totalorder %s120, %s122
      %p129 = scmp.eq.s32.totalorder %s30, 1
      %p130 = por %p128, %p129
      %p131 = scmp.ne.s32.totalorder %s122, %s123
      %p132 = scmp.eq.s32.totalorder %s30, 0
      %p133 = por %p131, %p132
      %p134 = scmp.ne.s32.totalorder %s122, %s123
      %p135 = scmp.eq.s32.totalorder %s31, 1
      %p136 = por %p134, %p135
      %p138 = scmp.ne.s32.totalorder %s123, %s137
      %p139 = scmp.eq.s32.totalorder %s31, 0
      %p140 = por %p138, %p139
      %s142 = sadd.s32 %s141, 1
      %p145 = scmp.eq.s32.totalorder %s25, 1
      %p146 = scmp.ne.s32.totalorder %s141, %s143
      %p147 = scmp.eq.s32.totalorder %s25, 0
      %p148 = por %p146, %p147
      %p149 = scmp.ne.s32.totalorder %s141, %s143
      %p150 = scmp.eq.s32.totalorder %s30, 1
      %p151 = por %p149, %p150
      %p152 = scmp.ne.s32.totalorder %s143, %s144
      %p153 = scmp.eq.s32.totalorder %s30, 0
      %p154 = por %p152, %p153
      %p155 = scmp.ne.s32.totalorder %s143, %s144
      %p156 = scmp.eq.s32.totalorder %s31, 1
      %p157 = por %p155, %p156
      %p159 = scmp.ne.s32.totalorder %s144, %s158
      %p160 = scmp.eq.s32.totalorder %s31, 0
      %p161 = por %p159, %p160
      %s163 = sadd.s32 %s162, 1
      %p166 = scmp.eq.s32.totalorder %s25, 1
      %p167 = scmp.ne.s32.totalorder %s162, %s164
      %p168 = scmp.eq.s32.totalorder %s25, 0
      %p169 = por %p167, %p168
      %p170 = scmp.ne.s32.totalorder %s162, %s164
      %p171 = scmp.eq.s32.totalorder %s30, 1
      %p172 = por %p170, %p171
      %p173 = scmp.ne.s32.totalorder %s164, %s165
      %p174 = scmp.eq.s32.totalorder %s30, 0
      %p175 = por %p173, %p174
      %p176 = scmp.ne.s32.totalorder %s164, %s165
      %p177 = scmp.eq.s32.totalorder %s31, 1
      %p178 = por %p176, %p177
      %p180 = scmp.ne.s32.totalorder %s165, %s179
      %p181 = scmp.eq.s32.totalorder %s31, 0
      %p182 = por %p180, %p181
      %s184 = sadd.s32 %s183, 1
      %p187 = scmp.eq.s32.totalorder %s25, 1
      %p188 = scmp.ne.s32.totalorder %s183, %s185
      %p189 = scmp.eq.s32.totalorder %s25, 0
      %p190 = por %p188, %p189
      %p191 = scmp.ne.s32.totalorder %s183, %s185
      %p192 = scmp.eq.s32.totalorder %s30, 1
      %p193 = por %p191, %p192
      %p194 = scmp.ne.s32.totalorder %s185, %s186
      %p195 = scmp.eq.s32.totalorder %s30, 0
      %p196 = por %p194, %p195
      %p197 = scmp.ne.s32.totalorder %s185, %s186
      %p198 = scmp.eq.s32.totalorder %s31, 1
      %p199 = por %p197, %p198
      %p201 = scmp.ne.s32.totalorder %s186, %s200
      %p202 = scmp.eq.s32.totalorder %s31, 0
      %p203 = por %p201, %p202
      %s205 = sadd.s32 %s204, 1
      %p208 = scmp.eq.s32.totalorder %s25, 1
      %p209 = scmp.ne.s32.totalorder %s204, %s206
      %p210 = scmp.eq.s32.totalorder %s25, 0
      %p211 = por %p209, %p210
      %p212 = scmp.ne.s32.totalorder %s204, %s206
      %p213 = scmp.eq.s32.totalorder %s30, 1
      %p214 = por %p212, %p213
      %p215 = scmp.ne.s32.totalorder %s206, %s207
      %p216 = scmp.eq.s32.totalorder %s30, 0
      %p217 = por %p215, %p216
      %p218 = scmp.ne.s32.totalorder %s206, %s207
      %p219 = scmp.eq.s32.totalorder %s31, 1
      %p220 = por %p218, %p219
      %p222 = scmp.ne.s32.totalorder %s207, %s221
      %p223 = scmp.eq.s32.totalorder %s31, 0
      %p224 = por %p222, %p223
      %s225 = ssub.s32 %s32, %s44
      %s226 = ssub.s32 %s33, %s40
      %s227 = sor.u32 %s225, %s226
      %p228 = scmp.eq.s32.totalorder %s227, 0
      %s230 = sadd.s32 %s229, 1
      %s231 = scalar_select %p228, %s229, %s230
      %p234 = pneg %p228
      %p235 = scmp.eq.s32.totalorder %s25, 1
      %p236 = por %p234, %p235
      %p237 = scmp.ne.s32.totalorder %s229, %s232
      %p238 = scmp.eq.s32.totalorder %s25, 0
      %p239 = por %p237, %p238
      %p240 = scmp.ne.s32.totalorder %s229, %s232
      %p241 = scmp.eq.s32.totalorder %s30, 1
      %p242 = por %p240, %p241
      %p243 = scmp.ne.s32.totalorder %s232, %s233
      %p244 = scmp.eq.s32.totalorder %s30, 0
      %p245 = por %p243, %p244
      %p246 = scmp.ne.s32.totalorder %s232, %s233
      %p247 = scmp.eq.s32.totalorder %s31, 1
      %p248 = por %p246, %p247
      %p250 = scmp.ne.s32.totalorder %s233, %s249
      %p251 = scmp.eq.s32.totalorder %s31, 0
      %p252 = por %p250, %p251
      %p253 = scmp.le.s32.totalorder 1, %s25
      %p254 = scmp.lt.s32.totalorder %s25, 3
      %p255 = pnand %p253, %p254
      %p256 = pneg %p255
      // Predicated region
      $region9: #{tpu_custom_call.1} parent=5 // pred_check
        _
      $region10: #{tpu_custom_call.1} parent=5 // pred_check_branch
        %258 = sbr.rel (%p255) target = $region12
      $region11: #{tpu_custom_call.1} parent=5 // pred_region
        %s259 = ssub.s32 %s25, 1
        // Predicated region
        $region13: #{tpu_custom_call.1} parent=11 // pred_check
          %p260 = pneg %p112
        $region14: #{tpu_custom_call.1} parent=11 // pred_check_branch
          %262 = sbr.rel (%p260) target = $region16
        $region15: #{tpu_custom_call.1} parent=11 // pred_region
          %s264 = ssub.s32 4096, 4096
          %265 = vsyncadd [#allocation6], %s264
          %s266 = sshll.u32 [#allocation7], 4
          %s267 = int_to_ptr.vmem [resolvable:$true] %s266
          %272 = dma.hbm_to_vmem [thread:$0]  %s2, 4096, %s267, [#allocation6], 256, 256, 16
        $region16: #{tpu_custom_call.1} parent=11 // pred_fallthru
          _
        // Predicated region
        $region17: #{tpu_custom_call.1} parent=11 // pred_check
          %p273 = pneg %p133
        $region18: #{tpu_custom_call.1} parent=11 // pred_check_branch
          %275 = sbr.rel (%p273) target = $region20
        $region19: #{tpu_custom_call.1} parent=11 // pred_region
          %s277 = ssub.s32 64, 64
          %278 = vsyncadd [#allocation9], %s277
          %s280 = sshll.u32 [#allocation8], 4
          %s281 = int_to_ptr.vmem [resolvable:$true] %s280
          %283 = dma.hbm_to_vmem [thread:$0]  %s3, 64, %s281, [#allocation9]
        $region20: #{tpu_custom_call.1} parent=11 // pred_fallthru
          _
        // Predicated region
        $region21: #{tpu_custom_call.1} parent=11 // pred_check
          %p284 = pneg %p154
        $region22: #{tpu_custom_call.1} parent=11 // pred_check_branch
          %286 = sbr.rel (%p284) target = $region24
        $region23: #{tpu_custom_call.1} parent=11 // pred_region
          %s288 = ssub.s32 8192, 8192
          %289 = vsyncadd [#allocation9], %s288
          %s290 = sshll.u32 [#allocation10], 4
          %s291 = int_to_ptr.vmem [resolvable:$true] %s290
          %296 = dma.hbm_to_vmem [thread:$0]  %s4, 8192, %s291, [#allocation9], 512, 512, 32
        $region24: #{tpu_custom_call.1} parent=11 // pred_fallthru
          _
        // Predicated region
        $region25: #{tpu_custom_call.1} parent=11 // pred_check
          %p297 = pneg %p175
        $region26: #{tpu_custom_call.1} parent=11 // pred_check_branch
          %299 = sbr.rel (%p297) target = $region28
        $region27: #{tpu_custom_call.1} parent=11 // pred_region
          _
        $region28: #{tpu_custom_call.1} parent=11 // pred_fallthru
          _
        // Predicated region
        $region29: #{tpu_custom_call.1} parent=11 // pred_check
          %p300 = pneg %p196
        $region30: #{tpu_custom_call.1} parent=11 // pred_check_branch
          %302 = sbr.rel (%p300) target = $region32
        $region31: #{tpu_custom_call.1} parent=11 // pred_region
          %s304 = ssub.s32 4096, 4096
          %305 = vsyncadd [#allocation12], %s304
          %s306 = sshll.u32 [#allocation11], 4
          %s307 = int_to_ptr.vmem [resolvable:$true] %s306
          %312 = dma.hbm_to_vmem [thread:$0]  %s6, 4096, %s307, [#allocation12], 64, 64, 4
        $region32: #{tpu_custom_call.1} parent=11 // pred_fallthru
          _
        // Predicated region
        $region33: #{tpu_custom_call.1} parent=11 // pred_check
          %p313 = pneg %p217
        $region34: #{tpu_custom_call.1} parent=11 // pred_check_branch
          %315 = sbr.rel (%p313) target = $region36
        $region35: #{tpu_custom_call.1} parent=11 // pred_region
          _
        $region36: #{tpu_custom_call.1} parent=11 // pred_fallthru
          _
      $region12: #{tpu_custom_call.1} parent=5 // pred_fallthru
        _
      %p316 = scmp.lt.s32.totalorder %s25, 2
      // Predicated region
      $region37: #{tpu_custom_call.1} parent=5 // pred_check
        %p317 = pneg %p316
      $region38: #{tpu_custom_call.1} parent=5 // pred_check_branch
        %319 = sbr.rel (%p317) target = $region40
      $region39: #{tpu_custom_call.1} parent=5 // pred_region
        // Predicated region
        $region41: #{tpu_custom_call.1} parent=39 // pred_check
          %p320 = pneg %p59
        $region42: #{tpu_custom_call.1} parent=39 // pred_check_branch
          %322 = sbr.rel (%p320) target = $region44
        $region43: #{tpu_custom_call.1} parent=39 // pred_region
          %s323 = sand.u32 %s49, 1
          %s324 = scalar_lea.sflag [#allocation3], %s323
          %s325 = sand.u32 %s49, 1
          %s326 = smul.addr %s325, 8
          %s327 = scalar_lea.vmem [#allocation2], %s326
          %s329 = ssub.s32 128, 128
          %330 = vsyncadd %s324, %s329
          %s331 = sadd.s32 %s33, %s32
          %s332 = smul.addr %s331, 128
          %s333 = scalar_lea.hbm %s0, %s332
          %s335 = sshll.u32 %s327, 4
          %s336 = int_to_ptr.vmem [resolvable:$true] %s335
          %338 = dma.hbm_to_vmem [thread:$0]  %s333, 128, %s336, %s324
        $region44: #{tpu_custom_call.1} parent=39 // pred_fallthru
          _
        // Predicated region
        $region45: #{tpu_custom_call.1} parent=39 // pred_check
          %p339 = pneg %p85
        $region46: #{tpu_custom_call.1} parent=39 // pred_check_branch
          %341 = sbr.rel (%p339) target = $region48
        $region47: #{tpu_custom_call.1} parent=39 // pred_region
          %s342 = sand.u32 %s25, 1
          %s343 = scalar_lea.sflag [#allocation6], %s342
          %s344 = sand.u32 %s75, 1
          %s345 = smul.addr %s344, 8
          %s346 = scalar_lea.vmem [#allocation5], %s345
          %s348 = ssub.s32 128, 128
          %349 = vsyncadd %s343, %s348
          %s350 = smul.addr %s32, 128
          %s351 = scalar_lea.hbm %s1, %s350
          %s353 = sshll.u32 %s346, 4
          %s354 = int_to_ptr.vmem [resolvable:$true] %s353
          %356 = dma.hbm_to_vmem [thread:$0]  %s351, 128, %s354, %s343
        $region48: #{tpu_custom_call.1} parent=39 // pred_fallthru
          _
      $region40: #{tpu_custom_call.1} parent=5 // pred_fallthru
        _
      %p357 = scmp.le.s32.totalorder 1, %s25
      %p358 = scmp.lt.s32.totalorder %s25, 3
      %p359 = pnand %p357, %p358
      %p360 = pneg %p359
      // Predicated region
      $region49: #{tpu_custom_call.1} parent=5 // pred_check
        _
      $region50: #{tpu_custom_call.1} parent=5 // pred_check_branch
        %362 = sbr.rel (%p359) target = $region52
      $region51: #{tpu_custom_call.1} parent=5 // pred_region
        %s363 = ssub.s32 %s25, 1
        %s364 = sand.u32 %s52, 1
        %s365 = scalar_lea.sflag [#allocation3], %s364
        %s366 = sand.u32 %s52, 1
        %s367 = smul.addr %s366, 8
        %s368 = scalar_lea.vmem [#allocation2], %s367
        // Predicated region
        $region53: #{tpu_custom_call.1} parent=51 // pred_check
          %p369 = pneg %p65
        $region54: #{tpu_custom_call.1} parent=51 // pred_check_branch
          %371 = sbr.rel (%p369) target = $region56
        $region55: #{tpu_custom_call.1} parent=51 // pred_region
          %372 = dma.done %s365, 128
        $region56: #{tpu_custom_call.1} parent=51 // pred_fallthru
          _
        %s373 = sand.u32 %s30, 1
        %s374 = scalar_lea.sflag [#allocation6], %s373
        %s375 = sand.u32 %s78, 1
        %s376 = smul.addr %s375, 8
        %s377 = scalar_lea.vmem [#allocation5], %s376
        // Predicated region
        $region57: #{tpu_custom_call.1} parent=51 // pred_check
          %p378 = pneg %p91
        $region58: #{tpu_custom_call.1} parent=51 // pred_check_branch
          %380 = sbr.rel (%p378) target = $region60
        $region59: #{tpu_custom_call.1} parent=51 // pred_region
          %381 = dma.done %s374, 128
        $region60: #{tpu_custom_call.1} parent=51 // pred_fallthru
          _
        // Predicated region
        $region61: #{tpu_custom_call.1} parent=51 // pred_check
          %p382 = pneg %p112
        $region62: #{tpu_custom_call.1} parent=51 // pred_check_branch
          %384 = sbr.rel (%p382) target = $region64
        $region63: #{tpu_custom_call.1} parent=51 // pred_region
          %385 = dma.done [#allocation6], 4096
        $region64: #{tpu_custom_call.1} parent=51 // pred_fallthru
          _
        // Predicated region
        $region65: #{tpu_custom_call.1} parent=51 // pred_check
          %p386 = pneg %p133
        $region66: #{tpu_custom_call.1} parent=51 // pred_check_branch
          %388 = sbr.rel (%p386) target = $region68
        $region67: #{tpu_custom_call.1} parent=51 // pred_region
          %389 = dma.done [#allocation9], 64
        $region68: #{tpu_custom_call.1} parent=51 // pred_fallthru
          _
        // Predicated region
        $region69: #{tpu_custom_call.1} parent=51 // pred_check
          %p390 = pneg %p154
        $region70: #{tpu_custom_call.1} parent=51 // pred_check_branch
          %392 = sbr.rel (%p390) target = $region72
        $region71: #{tpu_custom_call.1} parent=51 // pred_region
          %393 = dma.done [#allocation9], 8192
        $region72: #{tpu_custom_call.1} parent=51 // pred_fallthru
          _
        // Predicated region
        $region73: #{tpu_custom_call.1} parent=51 // pred_check
          %p394 = pneg %p196
        $region74: #{tpu_custom_call.1} parent=51 // pred_check_branch
          %396 = sbr.rel (%p394) target = $region76
        $region75: #{tpu_custom_call.1} parent=51 // pred_region
          %397 = dma.done [#allocation12], 4096
        $region76: #{tpu_custom_call.1} parent=51 // pred_fallthru
          _
        %s398 = sand.u32 %s52, 1
        %s399 = scalar_lea.sflag [#allocation3], %s398
        %s400 = sand.u32 %s52, 1
        %s401 = smul.addr %s400, 8
        %s402 = scalar_lea.vmem [#allocation2], %s401
        %p403 = pneg %p65
        %p404 = pneg %p62
        %s405 = sand.u32 %s30, 1
        %s406 = scalar_lea.sflag [#allocation6], %s405
        %s407 = sand.u32 %s78, 1
        %s408 = smul.addr %s407, 8
        %s409 = scalar_lea.vmem [#allocation5], %s408
        %p410 = pneg %p91
        %p411 = pneg %p88
        %p412 = pneg %p112
        %p413 = pneg %p109
        %p414 = pneg %p133
        %p415 = pneg %p130
        %p416 = pneg %p154
        %p417 = pneg %p151
        %p418 = pneg %p175
        %p419 = pneg %p172
        %p420 = pneg %p196
        %p421 = pneg %p193
        %p422 = pneg %p217
        %p423 = pneg %p214
        %p424 = pneg %p245
        %p425 = pneg %p242
        %s426 = sand.u32 %s232, 1
        %s427 = scalar_lea.sflag [#allocation4], %s426
        %s428 = sand.u32 %s232, 1
        %s429 = smul.addr %s428, 8
        %s430 = scalar_lea.vmem [#allocation13], %s429
        %v432 = vld [vmem:[%s368] sm:$0xff]
        %v433 = vpack.c.bf16 %v432, %v432
        %v434 = vld [vmem:[%s377] sm:$0xff]
        %v435 = vpack.c.bf16 %v434, %v434
        %v436 = vld [vmem:[#allocation7] sm:$0xff]
        %v437 = vld [vmem:[#allocation7 + $0x8] sm:$0xff]
        %v438 = vld [vmem:[#allocation7 + $0x10] sm:$0xff]
        %v439 = vld [vmem:[#allocation7 + $0x18] sm:$0xff]
        %v440 = vld [vmem:[#allocation7 + $0x20] sm:$0xff]
        %v441 = vld [vmem:[#allocation7 + $0x28] sm:$0xff]
        %v442 = vld [vmem:[#allocation7 + $0x30] sm:$0xff]
        %v443 = vld [vmem:[#allocation7 + $0x38] sm:$0xff]
        %v444 = vld [vmem:[#allocation7 + $0x40] sm:$0xff]
        %v445 = vld [vmem:[#allocation7 + $0x48] sm:$0xff]
        %v446 = vld [vmem:[#allocation7 + $0x50] sm:$0xff]
        %v447 = vld [vmem:[#allocation7 + $0x58] sm:$0xff]
        %v448 = vld [vmem:[#allocation7 + $0x60] sm:$0xff]
        %v449 = vld [vmem:[#allocation7 + $0x68] sm:$0xff]
        %v450 = vld [vmem:[#allocation7 + $0x70] sm:$0xff]
        %v451 = vld [vmem:[#allocation7 + $0x78] sm:$0xff]
        %v452 = vld [vmem:[#allocation7 + $0x80] sm:$0xff]
        %v453 = vld [vmem:[#allocation7 + $0x88] sm:$0xff]
        %v454 = vld [vmem:[#allocation7 + $0x90] sm:$0xff]
        %v455 = vld [vmem:[#allocation7 + $0x98] sm:$0xff]
        %v456 = vld [vmem:[#allocation7 + $0xa0] sm:$0xff]
        %v457 = vld [vmem:[#allocation7 + $0xa8] sm:$0xff]
        %v458 = vld [vmem:[#allocation7 + $0xb0] sm:$0xff]
        %v459 = vld [vmem:[#allocation7 + $0xb8] sm:$0xff]
        %v460 = vld [vmem:[#allocation7 + $0xc0] sm:$0xff]
        %v461 = vld [vmem:[#allocation7 + $0xc8] sm:$0xff]
        %v462 = vld [vmem:[#allocation7 + $0xd0] sm:$0xff]
        %v463 = vld [vmem:[#allocation7 + $0xd8] sm:$0xff]
        %v464 = vld [vmem:[#allocation7 + $0xe0] sm:$0xff]
        %v465 = vld [vmem:[#allocation7 + $0xe8] sm:$0xff]
        %v466 = vld [vmem:[#allocation7 + $0xf0] sm:$0xff]
        %v467 = vld [vmem:[#allocation7 + $0xf8] sm:$0xff]
        %v468 = vld [vmem:[#allocation8] sm:$0xf]
        %v470 = vlaneseq
        %v471 = vshrl.u32 %v470, 7
        %v472 = vsub.s32 0, %v471
        %v473 = vrot.slane %v468, %v472
        %v474 = vlaneseq
        %v475 = vshrl.u32 %v474, 7
        %v476 = vsub.s32 1, %v475
        %v477 = vrot.slane %v468, %v476
        %v478 = vlaneseq
        %v479 = vshrl.u32 %v478, 7
        %v480 = vsub.s32 2, %v479
        %v481 = vrot.slane %v468, %v480
        %v482 = vlaneseq
        %v483 = vshrl.u32 %v482, 7
        %v484 = vsub.s32 3, %v483
        %v485 = vrot.slane %v468, %v484
        %v522 = vunpack.c.l.b16 %v436
        %v523 = vunpack.c.h.b16 %v436
        %v524 = vunpack.c.l.b16 %v437
        %v525 = vunpack.c.h.b16 %v437
        %v526 = vunpack.c.l.b16 %v438
        %v527 = vunpack.c.h.b16 %v438
        %v528 = vunpack.c.l.b16 %v439
        %v529 = vunpack.c.h.b16 %v439
        %v530 = vunpack.c.l.b16 %v440
        %v531 = vunpack.c.h.b16 %v440
        %v532 = vunpack.c.l.b16 %v441
        %v533 = vunpack.c.h.b16 %v441
        %v534 = vunpack.c.l.b16 %v442
        %v535 = vunpack.c.h.b16 %v442
        %v536 = vunpack.c.l.b16 %v443
        %v537 = vunpack.c.h.b16 %v443
        %v538 = vunpack.c.l.b16 %v444
        %v539 = vunpack.c.h.b16 %v444
        %v540 = vunpack.c.l.b16 %v445
        %v541 = vunpack.c.h.b16 %v445
        %v542 = vunpack.c.l.b16 %v446
        %v543 = vunpack.c.h.b16 %v446
        %v544 = vunpack.c.l.b16 %v447
        %v545 = vunpack.c.h.b16 %v447
        %v546 = vunpack.c.l.b16 %v448
        %v547 = vunpack.c.h.b16 %v448
        %v548 = vunpack.c.l.b16 %v449
        %v549 = vunpack.c.h.b16 %v449
        %v550 = vunpack.c.l.b16 %v450
        %v551 = vunpack.c.h.b16 %v450
        %v552 = vunpack.c.l.b16 %v451
        %v553 = vunpack.c.h.b16 %v451
        %v554 = vunpack.c.l.b16 %v452
        %v555 = vunpack.c.h.b16 %v452
        %v556 = vunpack.c.l.b16 %v453
        %v557 = vunpack.c.h.b16 %v453
        %v558 = vunpack.c.l.b16 %v454
        %v559 = vunpack.c.h.b16 %v454
        %v560 = vunpack.c.l.b16 %v455
        %v561 = vunpack.c.h.b16 %v455
        %v562 = vunpack.c.l.b16 %v456
        %v563 = vunpack.c.h.b16 %v456
        %v564 = vunpack.c.l.b16 %v457
        %v565 = vunpack.c.h.b16 %v457
        %v566 = vunpack.c.l.b16 %v458
        %v567 = vunpack.c.h.b16 %v458
        %v568 = vunpack.c.l.b16 %v459
        %v569 = vunpack.c.h.b16 %v459
        %v570 = vunpack.c.l.b16 %v460
        %v571 = vunpack.c.h.b16 %v460
        %v572 = vunpack.c.l.b16 %v461
        %v573 = vunpack.c.h.b16 %v461
        %v574 = vunpack.c.l.b16 %v462
        %v575 = vunpack.c.h.b16 %v462
        %v576 = vunpack.c.l.b16 %v463
        %v577 = vunpack.c.h.b16 %v463
        %v578 = vunpack.c.l.b16 %v464
        %v579 = vunpack.c.h.b16 %v464
        %v580 = vunpack.c.l.b16 %v465
        %v581 = vunpack.c.h.b16 %v465
        %v582 = vunpack.c.l.b16 %v466
        %v583 = vunpack.c.h.b16 %v466
        %v584 = vunpack.c.l.b16 %v467
        %v585 = vunpack.c.h.b16 %v467
        %v586 = vpack.c.b16 %v526, %v522
        %v587 = vpack.c.b16 %v527, %v523
        %v588 = vpack.c.b16 %v528, %v524
        %v589 = vpack.c.b16 %v529, %v525
        %v590 = vpack.c.b16 %v534, %v530
        %v591 = vpack.c.b16 %v535, %v531
        %v592 = vpack.c.b16 %v536, %v532
        %v593 = vpack.c.b16 %v537, %v533
        %v594 = vpack.c.b16 %v542, %v538
        %v595 = vpack.c.b16 %v543, %v539
        %v596 = vpack.c.b16 %v544, %v540
        %v597 = vpack.c.b16 %v545, %v541
        %v598 = vpack.c.b16 %v550, %v546
        %v599 = vpack.c.b16 %v551, %v547
        %v600 = vpack.c.b16 %v552, %v548
        %v601 = vpack.c.b16 %v553, %v549
        %v602 = vpack.c.b16 %v558, %v554
        %v603 = vpack.c.b16 %v559, %v555
        %v604 = vpack.c.b16 %v560, %v556
        %v605 = vpack.c.b16 %v561, %v557
        %v606 = vpack.c.b16 %v566, %v562
        %v607 = vpack.c.b16 %v567, %v563
        %v608 = vpack.c.b16 %v568, %v564
        %v609 = vpack.c.b16 %v569, %v565
        %v610 = vpack.c.b16 %v574, %v570
        %v611 = vpack.c.b16 %v575, %v571
        %v612 = vpack.c.b16 %v576, %v572
        %v613 = vpack.c.b16 %v577, %v573
        %v614 = vpack.c.b16 %v582, %v578
        %v615 = vpack.c.b16 %v583, %v579
        %v616 = vpack.c.b16 %v584, %v580
        %v617 = vpack.c.b16 %v585, %v581
        %650 = vmatprep.subr.bf16.mxu0 %v615
        %651 = vmatpush1.bf16.msra.mxu0 %v614
        %652 = vmatprep.subr.bf16.mxu0 %v611
        %653 = vmatpush1.bf16.msra.mxu0 %v610
        %654 = vmatprep.subr.bf16.mxu0 %v607
        %655 = vmatpush1.bf16.msra.mxu0 %v606
        %656 = vmatprep.subr.bf16.mxu0 %v603
        %657 = vmatpush1.bf16.msra.mxu0 %v602
        %658 = vmatprep.subr.bf16.mxu0 %v599
        %659 = vmatpush1.bf16.msra.mxu0 %v598
        %660 = vmatprep.subr.bf16.mxu0 %v595
        %661 = vmatpush1.bf16.msra.mxu0 %v594
        %662 = vmatprep.subr.bf16.mxu0 %v591
        %663 = vmatpush1.bf16.msra.mxu0 %v590
        %664 = vmatprep.subr.bf16.mxu0 %v587
        %665 = vmatpush1.bf16.msra.mxu0 %v586
        %666 = vmatprep.subr.bf16.mxu0 0
        %667 = vmatpush2.bf16.msra.mxu0 0
        %668 = vmatprep.subr.bf16.mxu0 0
        %669 = vmatpush2.bf16.msra.mxu0 0
        %670 = vmatprep.subr.bf16.mxu0 0
        %671 = vmatpush2.bf16.msra.mxu0 0
        %672 = vmatprep.subr.bf16.mxu0 0
        %673 = vmatpush2.bf16.msra.mxu0 0
        %674 = vmatprep.subr.bf16.mxu0 0
        %675 = vmatpush2.bf16.msra.mxu0 0
        %676 = vmatprep.subr.bf16.mxu0 0
        %677 = vmatpush2.bf16.msra.mxu0 0
        %678 = vmatprep.subr.bf16.mxu0 0
        %679 = vmatpush2.bf16.msra.mxu0 0
        %680 = vmatprep.subr.bf16.mxu0 0
        %681 = vmatpush2.bf16.msra.mxu0 0
        %682 = vmatprep.mubr.bf16.mxu0 0
        %683 = vmatmul.mubr.bf16.gmra.mxu0 %v433
        %v684 = vpop.f32.mrf.mxu0
        %v685 = vadd.f32 %v473, %v684
        %v686 = vpop.f32.mrf.mxu0
        %v687 = vadd.f32 %v477, %v686
        %v688 = vpop.f32.mrf.mxu0
        %v689 = vpop.f32.mrf.mxu0
        %690 = vdwg.mxu0
        %691 = vmatprep.subr.bf16.mxu0 %v617
        %692 = vmatpush1.bf16.msra.mxu0 %v616
        %693 = vmatprep.subr.bf16.mxu0 %v613
        %694 = vmatpush1.bf16.msra.mxu0 %v612
        %695 = vmatprep.subr.bf16.mxu0 %v609
        %696 = vmatpush1.bf16.msra.mxu0 %v608
        %697 = vmatprep.subr.bf16.mxu0 %v605
        %698 = vmatpush1.bf16.msra.mxu0 %v604
        %699 = vmatprep.subr.bf16.mxu0 %v601
        %700 = vmatpush1.bf16.msra.mxu0 %v600
        %701 = vmatprep.subr.bf16.mxu0 %v597
        %702 = vmatpush1.bf16.msra.mxu0 %v596
        %703 = vmatprep.subr.bf16.mxu0 %v593
        %704 = vmatpush1.bf16.msra.mxu0 %v592
        %705 = vmatprep.subr.bf16.mxu0 %v589
        %706 = vmatpush1.bf16.msra.mxu0 %v588
        %707 = vmatprep.subr.bf16.mxu0 0
        %708 = vmatpush2.bf16.msra.mxu0 0
        %709 = vmatprep.subr.bf16.mxu0 0
        %710 = vmatpush2.bf16.msra.mxu0 0
        %711 = vmatprep.subr.bf16.mxu0 0
        %712 = vmatpush2.bf16.msra.mxu0 0
        %713 = vmatprep.subr.bf16.mxu0 0
        %714 = vmatpush2.bf16.msra.mxu0 0
        %715 = vmatprep.subr.bf16.mxu0 0
        %716 = vmatpush2.bf16.msra.mxu0 0
        %717 = vmatprep.subr.bf16.mxu0 0
        %718 = vmatpush2.bf16.msra.mxu0 0
        %719 = vmatprep.subr.bf16.mxu0 0
        %720 = vmatpush2.bf16.msra.mxu0 0
        %721 = vmatprep.subr.bf16.mxu0 0
        %722 = vmatpush2.bf16.msra.mxu0 0
        %723 = vmatprep.mubr.bf16.mxu0 0
        %724 = vmatmul.mubr.bf16.gmra.mxu0 %v433
        %v725 = vpop.f32.mrf.mxu0
        %v726 = vadd.f32 %v481, %v725
        %v727 = vpop.f32.mrf.mxu0
        %v728 = vadd.f32 %v485, %v727
        %v729 = vpop.f32.mrf.mxu0
        %v730 = vpop.f32.mrf.mxu0
        %731 = vdwg.mxu0
        %v732 = vld [vmem:[#allocation10] sm:$0xff]
        %v733 = vld [vmem:[#allocation10 + $0x8] sm:$0xff]
        %v734 = vld [vmem:[#allocation10 + $0x10] sm:$0xff]
        %v735 = vld [vmem:[#allocation10 + $0x18] sm:$0xff]
        %v736 = vld [vmem:[#allocation10 + $0x20] sm:$0xff]
        %v737 = vld [vmem:[#allocation10 + $0x28] sm:$0xff]
        %v738 = vld [vmem:[#allocation10 + $0x30] sm:$0xff]
        %v739 = vld [vmem:[#allocation10 + $0x38] sm:$0xff]
        %v740 = vld [vmem:[#allocation10 + $0x40] sm:$0xff]
        %v741 = vld [vmem:[#allocation10 + $0x48] sm:$0xff]
        %v742 = vld [vmem:[#allocation10 + $0x50] sm:$0xff]
        %v743 = vld [vmem:[#allocation10 + $0x58] sm:$0xff]
        %v744 = vld [vmem:[#allocation10 + $0x60] sm:$0xff]
        %v745 = vld [vmem:[#allocation10 + $0x68] sm:$0xff]
        %v746 = vld [vmem:[#allocation10 + $0x70] sm:$0xff]
        %v747 = vld [vmem:[#allocation10 + $0x78] sm:$0xff]
        %v748 = vld [vmem:[#allocation10 + $0x80] sm:$0xff]
        %v749 = vld [vmem:[#allocation10 + $0x88] sm:$0xff]
        %v750 = vld [vmem:[#allocation10 + $0x90] sm:$0xff]
        %v751 = vld [vmem:[#allocation10 + $0x98] sm:$0xff]
        %v752 = vld [vmem:[#allocation10 + $0xa0] sm:$0xff]
        %v753 = vld [vmem:[#allocation10 + $0xa8] sm:$0xff]
        %v754 = vld [vmem:[#allocation10 + $0xb0] sm:$0xff]
        %v755 = vld [vmem:[#allocation10 + $0xb8] sm:$0xff]
        %v756 = vld [vmem:[#allocation10 + $0xc0] sm:$0xff]
        %v757 = vld [vmem:[#allocation10 + $0xc8] sm:$0xff]
        %v758 = vld [vmem:[#allocation10 + $0xd0] sm:$0xff]
        %v759 = vld [vmem:[#allocation10 + $0xd8] sm:$0xff]
        %v760 = vld [vmem:[#allocation10 + $0xe0] sm:$0xff]
        %v761 = vld [vmem:[#allocation10 + $0xe8] sm:$0xff]
        %v762 = vld [vmem:[#allocation10 + $0xf0] sm:$0xff]
        %v763 = vld [vmem:[#allocation10 + $0xf8] sm:$0xff]
        %v764 = vld [vmem:[#allocation10 + $0x100] sm:$0xff]
        %v765 = vld [vmem:[#allocation10 + $0x108] sm:$0xff]
        %v766 = vld [vmem:[#allocation10 + $0x110] sm:$0xff]
        %v767 = vld [vmem:[#allocation10 + $0x118] sm:$0xff]
        %v768 = vld [vmem:[#allocation10 + $0x120] sm:$0xff]
        %v769 = vld [vmem:[#allocation10 + $0x128] sm:$0xff]
        %v770 = vld [vmem:[#allocation10 + $0x130] sm:$0xff]
        %v771 = vld [vmem:[#allocation10 + $0x138] sm:$0xff]
        %v772 = vld [vmem:[#allocation10 + $0x140] sm:$0xff]
        %v773 = vld [vmem:[#allocation10 + $0x148] sm:$0xff]
        %v774 = vld [vmem:[#allocation10 + $0x150] sm:$0xff]
        %v775 = vld [vmem:[#allocation10 + $0x158] sm:$0xff]
        %v776 = vld [vmem:[#allocation10 + $0x160] sm:$0xff]
        %v777 = vld [vmem:[#allocation10 + $0x168] sm:$0xff]
        %v778 = vld [vmem:[#allocation10 + $0x170] sm:$0xff]
        %v779 = vld [vmem:[#allocation10 + $0x178] sm:$0xff]
        %v780 = vld [vmem:[#allocation10 + $0x180] sm:$0xff]
        %v781 = vld [vmem:[#allocation10 + $0x188] sm:$0xff]
        %v782 = vld [vmem:[#allocation10 + $0x190] sm:$0xff]
        %v783 = vld [vmem:[#allocation10 + $0x198] sm:$0xff]
        %v784 = vld [vmem:[#allocation10 + $0x1a0] sm:$0xff]
        %v785 = vld [vmem:[#allocation10 + $0x1a8] sm:$0xff]
        %v786 = vld [vmem:[#allocation10 + $0x1b0] sm:$0xff]
        %v787 = vld [vmem:[#allocation10 + $0x1b8] sm:$0xff]
        %v788 = vld [vmem:[#allocation10 + $0x1c0] sm:$0xff]
        %v789 = vld [vmem:[#allocation10 + $0x1c8] sm:$0xff]
        %v790 = vld [vmem:[#allocation10 + $0x1d0] sm:$0xff]
        %v791 = vld [vmem:[#allocation10 + $0x1d8] sm:$0xff]
        %v792 = vld [vmem:[#allocation10 + $0x1e0] sm:$0xff]
        %v793 = vld [vmem:[#allocation10 + $0x1e8] sm:$0xff]
        %v794 = vld [vmem:[#allocation10 + $0x1f0] sm:$0xff]
        %v795 = vld [vmem:[#allocation10 + $0x1f8] sm:$0xff]
        %v796 = vld [vmem:[%s5] sm:$0xff]
        %v798 = vlaneseq
        %v799 = vshrl.u32 %v798, 7
        %v800 = vsub.s32 0, %v799
        %v801 = vrot.slane %v796, %v800
        %v802 = vlaneseq
        %v803 = vshrl.u32 %v802, 7
        %v804 = vsub.s32 1, %v803
        %v805 = vrot.slane %v796, %v804
        %v806 = vlaneseq
        %v807 = vshrl.u32 %v806, 7
        %v808 = vsub.s32 2, %v807
        %v809 = vrot.slane %v796, %v808
        %v810 = vlaneseq
        %v811 = vshrl.u32 %v810, 7
        %v812 = vsub.s32 3, %v811
        %v813 = vrot.slane %v796, %v812
        %v814 = vlaneseq
        %v815 = vshrl.u32 %v814, 7
        %v816 = vsub.s32 4, %v815
        %v817 = vrot.slane %v796, %v816
        %v818 = vlaneseq
        %v819 = vshrl.u32 %v818, 7
        %v820 = vsub.s32 5, %v819
        %v821 = vrot.slane %v796, %v820
        %v822 = vlaneseq
        %v823 = vshrl.u32 %v822, 7
        %v824 = vsub.s32 6, %v823
        %v825 = vrot.slane %v796, %v824
        %v826 = vlaneseq
        %v827 = vshrl.u32 %v826, 7
        %v828 = vsub.s32 7, %v827
        %v829 = vrot.slane %v796, %v828
        %v902 = vunpack.c.l.b16 %v732
        %v903 = vunpack.c.h.b16 %v732
        %v904 = vunpack.c.l.b16 %v733
        %v905 = vunpack.c.h.b16 %v733
        %v906 = vunpack.c.l.b16 %v734
        %v907 = vunpack.c.h.b16 %v734
        %v908 = vunpack.c.l.b16 %v735
        %v909 = vunpack.c.h.b16 %v735
        %v910 = vunpack.c.l.b16 %v736
        %v911 = vunpack.c.h.b16 %v736
        %v912 = vunpack.c.l.b16 %v737
        %v913 = vunpack.c.h.b16 %v737
        %v914 = vunpack.c.l.b16 %v738
        %v915 = vunpack.c.h.b16 %v738
        %v916 = vunpack.c.l.b16 %v739
        %v917 = vunpack.c.h.b16 %v739
        %v918 = vunpack.c.l.b16 %v740
        %v919 = vunpack.c.h.b16 %v740
        %v920 = vunpack.c.l.b16 %v741
        %v921 = vunpack.c.h.b16 %v741
        %v922 = vunpack.c.l.b16 %v742
        %v923 = vunpack.c.h.b16 %v742
        %v924 = vunpack.c.l.b16 %v743
        %v925 = vunpack.c.h.b16 %v743
        %v926 = vunpack.c.l.b16 %v744
        %v927 = vunpack.c.h.b16 %v744
        %v928 = vunpack.c.l.b16 %v745
        %v929 = vunpack.c.h.b16 %v745
        %v930 = vunpack.c.l.b16 %v746
        %v931 = vunpack.c.h.b16 %v746
        %v932 = vunpack.c.l.b16 %v747
        %v933 = vunpack.c.h.b16 %v747
        %v934 = vunpack.c.l.b16 %v748
        %v935 = vunpack.c.h.b16 %v748
        %v936 = vunpack.c.l.b16 %v749
        %v937 = vunpack.c.h.b16 %v749
        %v938 = vunpack.c.l.b16 %v750
        %v939 = vunpack.c.h.b16 %v750
        %v940 = vunpack.c.l.b16 %v751
        %v941 = vunpack.c.h.b16 %v751
        %v942 = vunpack.c.l.b16 %v752
        %v943 = vunpack.c.h.b16 %v752
        %v944 = vunpack.c.l.b16 %v753
        %v945 = vunpack.c.h.b16 %v753
        %v946 = vunpack.c.l.b16 %v754
        %v947 = vunpack.c.h.b16 %v754
        %v948 = vunpack.c.l.b16 %v755
        %v949 = vunpack.c.h.b16 %v755
        %v950 = vunpack.c.l.b16 %v756
        %v951 = vunpack.c.h.b16 %v756
        %v952 = vunpack.c.l.b16 %v757
        %v953 = vunpack.c.h.b16 %v757
        %v954 = vunpack.c.l.b16 %v758
        %v955 = vunpack.c.h.b16 %v758
        %v956 = vunpack.c.l.b16 %v759
        %v957 = vunpack.c.h.b16 %v759
        %v958 = vunpack.c.l.b16 %v760
        %v959 = vunpack.c.h.b16 %v760
        %v960 = vunpack.c.l.b16 %v761
        %v961 = vunpack.c.h.b16 %v761
        %v962 = vunpack.c.l.b16 %v762
        %v963 = vunpack.c.h.b16 %v762
        %v964 = vunpack.c.l.b16 %v763
        %v965 = vunpack.c.h.b16 %v763
        %v966 = vunpack.c.l.b16 %v764
        %v967 = vunpack.c.h.b16 %v764
        %v968 = vunpack.c.l.b16 %v765
        %v969 = vunpack.c.h.b16 %v765
        %v970 = vunpack.c.l.b16 %v766
        %v971 = vunpack.c.h.b16 %v766
        %v972 = vunpack.c.l.b16 %v767
        %v973 = vunpack.c.h.b16 %v767
        %v974 = vunpack.c.l.b16 %v768
        %v975 = vunpack.c.h.b16 %v768
        %v976 = vunpack.c.l.b16 %v769
        %v977 = vunpack.c.h.b16 %v769
        %v978 = vunpack.c.l.b16 %v770
        %v979 = vunpack.c.h.b16 %v770
        %v980 = vunpack.c.l.b16 %v771
        %v981 = vunpack.c.h.b16 %v771
        %v982 = vunpack.c.l.b16 %v772
        %v983 = vunpack.c.h.b16 %v772
        %v984 = vunpack.c.l.b16 %v773
        %v985 = vunpack.c.h.b16 %v773
        %v986 = vunpack.c.l.b16 %v774
        %v987 = vunpack.c.h.b16 %v774
        %v988 = vunpack.c.l.b16 %v775
        %v989 = vunpack.c.h.b16 %v775
        %v990 = vunpack.c.l.b16 %v776
        %v991 = vunpack.c.h.b16 %v776
        %v992 = vunpack.c.l.b16 %v777
        %v993 = vunpack.c.h.b16 %v777
        %v994 = vunpack.c.l.b16 %v778
        %v995 = vunpack.c.h.b16 %v778
        %v996 = vunpack.c.l.b16 %v779
        %v997 = vunpack.c.h.b16 %v779
        %v998 = vunpack.c.l.b16 %v780
        %v999 = vunpack.c.h.b16 %v780
        %v1000 = vunpack.c.l.b16 %v781
        %v1001 = vunpack.c.h.b16 %v781
        %v1002 = vunpack.c.l.b16 %v782
        %v1003 = vunpack.c.h.b16 %v782
        %v1004 = vunpack.c.l.b16 %v783
        %v1005 = vunpack.c.h.b16 %v783
        %v1006 = vunpack.c.l.b16 %v784
        %v1007 = vunpack.c.h.b16 %v784
        %v1008 = vunpack.c.l.b16 %v785
        %v1009 = vunpack.c.h.b16 %v785
        %v1010 = vunpack.c.l.b16 %v786
        %v1011 = vunpack.c.h.b16 %v786
        %v1012 = vunpack.c.l.b16 %v787
        %v1013 = vunpack.c.h.b16 %v787
        %v1014 = vunpack.c.l.b16 %v788
        %v1015 = vunpack.c.h.b16 %v788
        %v1016 = vunpack.c.l.b16 %v789
        %v1017 = vunpack.c.h.b16 %v789
        %v1018 = vunpack.c.l.b16 %v790
        %v1019 = vunpack.c.h.b16 %v790
        %v1020 = vunpack.c.l.b16 %v791
        %v1021 = vunpack.c.h.b16 %v791
        %v1022 = vunpack.c.l.b16 %v792
        %v1023 = vunpack.c.h.b16 %v792
        %v1024 = vunpack.c.l.b16 %v793
        %v1025 = vunpack.c.h.b16 %v793
        %v1026 = vunpack.c.l.b16 %v794
        %v1027 = vunpack.c.h.b16 %v794
        %v1028 = vunpack.c.l.b16 %v795
        %v1029 = vunpack.c.h.b16 %v795
        %v1030 = vpack.c.b16 %v910, %v902
        %v1031 = vpack.c.b16 %v911, %v903
        %v1032 = vpack.c.b16 %v912, %v904
        %v1033 = vpack.c.b16 %v913, %v905
        %v1034 = vpack.c.b16 %v914, %v906
        %v1035 = vpack.c.b16 %v915, %v907
        %v1036 = vpack.c.b16 %v916, %v908
        %v1037 = vpack.c.b16 %v917, %v909
        %v1038 = vpack.c.b16 %v926, %v918
        %v1039 = vpack.c.b16 %v927, %v919
        %v1040 = vpack.c.b16 %v928, %v920
        %v1041 = vpack.c.b16 %v929, %v921
        %v1042 = vpack.c.b16 %v930, %v922
        %v1043 = vpack.c.b16 %v931, %v923
        %v1044 = vpack.c.b16 %v932, %v924
        %v1045 = vpack.c.b16 %v933, %v925
        %v1046 = vpack.c.b16 %v942, %v934
        %v1047 = vpack.c.b16 %v943, %v935
        %v1048 = vpack.c.b16 %v944, %v936
        %v1049 = vpack.c.b16 %v945, %v937
        %v1050 = vpack.c.b16 %v946, %v938
        %v1051 = vpack.c.b16 %v947, %v939
        %v1052 = vpack.c.b16 %v948, %v940
        %v1053 = vpack.c.b16 %v949, %v941
        %v1054 = vpack.c.b16 %v958, %v950
        %v1055 = vpack.c.b16 %v959, %v951
        %v1056 = vpack.c.b16 %v960, %v952
        %v1057 = vpack.c.b16 %v961, %v953
        %v1058 = vpack.c.b16 %v962, %v954
        %v1059 = vpack.c.b16 %v963, %v955
        %v1060 = vpack.c.b16 %v964, %v956
        %v1061 = vpack.c.b16 %v965, %v957
        %v1062 = vpack.c.b16 %v974, %v966
        %v1063 = vpack.c.b16 %v975, %v967
        %v1064 = vpack.c.b16 %v976, %v968
        %v1065 = vpack.c.b16 %v977, %v969
        %v1066 = vpack.c.b16 %v978, %v970
        %v1067 = vpack.c.b16 %v979, %v971
        %v1068 = vpack.c.b16 %v980, %v972
        %v1069 = vpack.c.b16 %v981, %v973
        %v1070 = vpack.c.b16 %v990, %v982
        %v1071 = vpack.c.b16 %v991, %v983
        %v1072 = vpack.c.b16 %v992, %v984
        %v1073 = vpack.c.b16 %v993, %v985
        %v1074 = vpack.c.b16 %v994, %v986
        %v1075 = vpack.c.b16 %v995, %v987
        %v1076 = vpack.c.b16 %v996, %v988
        %v1077 = vpack.c.b16 %v997, %v989
        %v1078 = vpack.c.b16 %v1006, %v998
        %v1079 = vpack.c.b16 %v1007, %v999
        %v1080 = vpack.c.b16 %v1008, %v1000
        %v1081 = vpack.c.b16 %v1009, %v1001
        %v1082 = vpack.c.b16 %v1010, %v1002
        %v1083 = vpack.c.b16 %v1011, %v1003
        %v1084 = vpack.c.b16 %v1012, %v1004
        %v1085 = vpack.c.b16 %v1013, %v1005
        %v1086 = vpack.c.b16 %v1022, %v1014
        %v1087 = vpack.c.b16 %v1023, %v1015
        %v1088 = vpack.c.b16 %v1024, %v1016
        %v1089 = vpack.c.b16 %v1025, %v1017
        %v1090 = vpack.c.b16 %v1026, %v1018
        %v1091 = vpack.c.b16 %v1027, %v1019
        %v1092 = vpack.c.b16 %v1028, %v1020
        %v1093 = vpack.c.b16 %v1029, %v1021
        %1158 = vmatprep.subr.bf16.mxu0 %v1087
        %1159 = vmatpush1.bf16.msra.mxu0 %v1086
        %1160 = vmatprep.subr.bf16.mxu0 %v1079
        %1161 = vmatpush1.bf16.msra.mxu0 %v1078
        %1162 = vmatprep.subr.bf16.mxu0 %v1071
        %1163 = vmatpush1.bf16.msra.mxu0 %v1070
        %1164 = vmatprep.subr.bf16.mxu0 %v1063
        %1165 = vmatpush1.bf16.msra.mxu0 %v1062
        %1166 = vmatprep.subr.bf16.mxu0 %v1055
        %1167 = vmatpush1.bf16.msra.mxu0 %v1054
        %1168 = vmatprep.subr.bf16.mxu0 %v1047
        %1169 = vmatpush1.bf16.msra.mxu0 %v1046
        %1170 = vmatprep.subr.bf16.mxu0 %v1039
        %1171 = vmatpush1.bf16.msra.mxu0 %v1038
        %1172 = vmatprep.subr.bf16.mxu0 %v1031
        %1173 = vmatpush1.bf16.msra.mxu0 %v1030
        %1174 = vmatprep.subr.bf16.mxu0 0
        %1175 = vmatpush2.bf16.msra.mxu0 0
        %1176 = vmatprep.subr.bf16.mxu0 0
        %1177 = vmatpush2.bf16.msra.mxu0 0
        %1178 = vmatprep.subr.bf16.mxu0 0
        %1179 = vmatpush2.bf16.msra.mxu0 0
        %1180 = vmatprep.subr.bf16.mxu0 0
        %1181 = vmatpush2.bf16.msra.mxu0 0
        %1182 = vmatprep.subr.bf16.mxu0 0
        %1183 = vmatpush2.bf16.msra.mxu0 0
        %1184 = vmatprep.subr.bf16.mxu0 0
        %1185 = vmatpush2.bf16.msra.mxu0 0
        %1186 = vmatprep.subr.bf16.mxu0 0
        %1187 = vmatpush2.bf16.msra.mxu0 0
        %1188 = vmatprep.subr.bf16.mxu0 0
        %1189 = vmatpush2.bf16.msra.mxu0 0
        %1190 = vmatprep.mubr.bf16.mxu0 0
        %1191 = vmatmul.mubr.bf16.gmra.mxu0 %v435
        %v1192 = vpop.f32.mrf.mxu0
        %v1193 = vadd.f32 %v801, %v1192
        %v1194 = vpop.f32.mrf.mxu0
        %v1195 = vadd.f32 %v805, %v1194
        %v1196 = vpop.f32.mrf.mxu0
        %v1197 = vpop.f32.mrf.mxu0
        %1198 = vdwg.mxu0
        %1199 = vmatprep.subr.bf16.mxu0 %v1089
        %1200 = vmatpush1.bf16.msra.mxu0 %v1088
        %1201 = vmatprep.subr.bf16.mxu0 %v1081
        %1202 = vmatpush1.bf16.msra.mxu0 %v1080
        %1203 = vmatprep.subr.bf16.mxu0 %v1073
        %1204 = vmatpush1.bf16.msra.mxu0 %v1072
        %1205 = vmatprep.subr.bf16.mxu0 %v1065
        %1206 = vmatpush1.bf16.msra.mxu0 %v1064
        %1207 = vmatprep.subr.bf16.mxu0 %v1057
        %1208 = vmatpush1.bf16.msra.mxu0 %v1056
        %1209 = vmatprep.subr.bf16.mxu0 %v1049
        %1210 = vmatpush1.bf16.msra.mxu0 %v1048
        %1211 = vmatprep.subr.bf16.mxu0 %v1041
        %1212 = vmatpush1.bf16.msra.mxu0 %v1040
        %1213 = vmatprep.subr.bf16.mxu0 %v1033
        %1214 = vmatpush1.bf16.msra.mxu0 %v1032
        %1215 = vmatprep.subr.bf16.mxu0 0
        %1216 = vmatpush2.bf16.msra.mxu0 0
        %1217 = vmatprep.subr.bf16.mxu0 0
        %1218 = vmatpush2.bf16.msra.mxu0 0
        %1219 = vmatprep.subr.bf16.mxu0 0
        %1220 = vmatpush2.bf16.msra.mxu0 0
        %1221 = vmatprep.subr.bf16.mxu0 0
        %1222 = vmatpush2.bf16.msra.mxu0 0
        %1223 = vmatprep.subr.bf16.mxu0 0
        %1224 = vmatpush2.bf16.msra.mxu0 0
        %1225 = vmatprep.subr.bf16.mxu0 0
        %1226 = vmatpush2.bf16.msra.mxu0 0
        %1227 = vmatprep.subr.bf16.mxu0 0
        %1228 = vmatpush2.bf16.msra.mxu0 0
        %1229 = vmatprep.subr.bf16.mxu0 0
        %1230 = vmatpush2.bf16.msra.mxu0 0
        %1231 = vmatprep.mubr.bf16.mxu0 0
        %1232 = vmatmul.mubr.bf16.gmra.mxu0 %v435
        %v1233 = vpop.f32.mrf.mxu0
        %v1234 = vadd.f32 %v809, %v1233
        %v1235 = vpop.f32.mrf.mxu0
        %v1236 = vadd.f32 %v813, %v1235
        %v1237 = vpop.f32.mrf.mxu0
        %v1238 = vpop.f32.mrf.mxu0
        %1239 = vdwg.mxu0
        %1240 = vmatprep.subr.bf16.mxu0 %v1091
        %1241 = vmatpush1.bf16.msra.mxu0 %v1090
        %1242 = vmatprep.subr.bf16.mxu0 %v1083
        %1243 = vmatpush1.bf16.msra.mxu0 %v1082
        %1244 = vmatprep.subr.bf16.mxu0 %v1075
        %1245 = vmatpush1.bf16.msra.mxu0 %v1074
        %1246 = vmatprep.subr.bf16.mxu0 %v1067
        %1247 = vmatpush1.bf16.msra.mxu0 %v1066
        %1248 = vmatprep.subr.bf16.mxu0 %v1059
        %1249 = vmatpush1.bf16.msra.mxu0 %v1058
        %1250 = vmatprep.subr.bf16.mxu0 %v1051
        %1251 = vmatpush1.bf16.msra.mxu0 %v1050
        %1252 = vmatprep.subr.bf16.mxu0 %v1043
        %1253 = vmatpush1.bf16.msra.mxu0 %v1042
        %1254 = vmatprep.subr.bf16.mxu0 %v1035
        %1255 = vmatpush1.bf16.msra.mxu0 %v1034
        %1256 = vmatprep.subr.bf16.mxu0 0
        %1257 = vmatpush2.bf16.msra.mxu0 0
        %1258 = vmatprep.subr.bf16.mxu0 0
        %1259 = vmatpush2.bf16.msra.mxu0 0
        %1260 = vmatprep.subr.bf16.mxu0 0
        %1261 = vmatpush2.bf16.msra.mxu0 0
        %1262 = vmatprep.subr.bf16.mxu0 0
        %1263 = vmatpush2.bf16.msra.mxu0 0
        %1264 = vmatprep.subr.bf16.mxu0 0
        %1265 = vmatpush2.bf16.msra.mxu0 0
        %1266 = vmatprep.subr.bf16.mxu0 0
        %1267 = vmatpush2.bf16.msra.mxu0 0
        %1268 = vmatprep.subr.bf16.mxu0 0
        %1269 = vmatpush2.bf16.msra.mxu0 0
        %1270 = vmatprep.subr.bf16.mxu0 0
        %1271 = vmatpush2.bf16.msra.mxu0 0
        %1272 = vmatprep.mubr.bf16.mxu0 0
        %1273 = vmatmul.mubr.bf16.gmra.mxu0 %v435
        %v1274 = vpop.f32.mrf.mxu0
        %v1275 = vadd.f32 %v817, %v1274
        %v1276 = vpop.f32.mrf.mxu0
        %v1277 = vadd.f32 %v821, %v1276
        %v1278 = vpop.f32.mrf.mxu0
        %v1279 = vpop.f32.mrf.mxu0
        %1280 = vdwg.mxu0
        %1281 = vmatprep.subr.bf16.mxu0 %v1093
        %1282 = vmatpush1.bf16.msra.mxu0 %v1092
        %1283 = vmatprep.subr.bf16.mxu0 %v1085
        %1284 = vmatpush1.bf16.msra.mxu0 %v1084
        %1285 = vmatprep.subr.bf16.mxu0 %v1077
        %1286 = vmatpush1.bf16.msra.mxu0 %v1076
        %1287 = vmatprep.subr.bf16.mxu0 %v1069
        %1288 = vmatpush1.bf16.msra.mxu0 %v1068
        %1289 = vmatprep.subr.bf16.mxu0 %v1061
        %1290 = vmatpush1.bf16.msra.mxu0 %v1060
        %1291 = vmatprep.subr.bf16.mxu0 %v1053
        %1292 = vmatpush1.bf16.msra.mxu0 %v1052
        %1293 = vmatprep.subr.bf16.mxu0 %v1045
        %1294 = vmatpush1.bf16.msra.mxu0 %v1044
        %1295 = vmatprep.subr.bf16.mxu0 %v1037
        %1296 = vmatpush1.bf16.msra.mxu0 %v1036
        %1297 = vmatprep.subr.bf16.mxu0 0
        %1298 = vmatpush2.bf16.msra.mxu0 0
        %1299 = vmatprep.subr.bf16.mxu0 0
        %1300 = vmatpush2.bf16.msra.mxu0 0
        %1301 = vmatprep.subr.bf16.mxu0 0
        %1302 = vmatpush2.bf16.msra.mxu0 0
        %1303 = vmatprep.subr.bf16.mxu0 0
        %1304 = vmatpush2.bf16.msra.mxu0 0
        %1305 = vmatprep.subr.bf16.mxu0 0
        %1306 = vmatpush2.bf16.msra.mxu0 0
        %1307 = vmatprep.subr.bf16.mxu0 0
        %1308 = vmatpush2.bf16.msra.mxu0 0
        %1309 = vmatprep.subr.bf16.mxu0 0
        %1310 = vmatpush2.bf16.msra.mxu0 0
        %1311 = vmatprep.subr.bf16.mxu0 0
        %1312 = vmatpush2.bf16.msra.mxu0 0
        %1313 = vmatprep.mubr.bf16.mxu0 0
        %1314 = vmatmul.mubr.bf16.gmra.mxu0 %v435
        %v1315 = vpop.f32.mrf.mxu0
        %v1316 = vadd.f32 %v825, %v1315
        %v1317 = vpop.f32.mrf.mxu0
        %v1318 = vadd.f32 %v829, %v1317
        %v1319 = vpop.f32.mrf.mxu0
        %v1320 = vpop.f32.mrf.mxu0
        %1321 = vdwg.mxu0
        %v1322 = vpack.c.bf16 %v685, %v685
        %v1323 = vpack.c.bf16 %v687, %v687
        %v1324 = vpack.c.bf16 %v726, %v726
        %v1325 = vpack.c.bf16 %v728, %v728
        %v1326 = vpack.c.bf16 %v1193, %v1193
        %v1327 = vpack.c.bf16 %v1195, %v1195
        %v1328 = vpack.c.bf16 %v1234, %v1234
        %v1329 = vpack.c.bf16 %v1236, %v1236
        %v1330 = vpack.c.bf16 %v1275, %v1275
        %v1331 = vpack.c.bf16 %v1277, %v1277
        %v1332 = vpack.c.bf16 %v1316, %v1316
        %v1333 = vpack.c.bf16 %v1318, %v1318
        %v1334 = vld [vmem:[#allocation11] sm:$0xf]
        %v1335 = vld [vmem:[#allocation11 + $0x4] sm:$0xf]
        %v1336 = vld [vmem:[#allocation11 + $0x8] sm:$0xf]
        %v1337 = vld [vmem:[#allocation11 + $0xc] sm:$0xf]
        %v1338 = vld [vmem:[#allocation11 + $0x10] sm:$0xf]
        %v1339 = vld [vmem:[#allocation11 + $0x14] sm:$0xf]
        %v1340 = vld [vmem:[#allocation11 + $0x18] sm:$0xf]
        %v1341 = vld [vmem:[#allocation11 + $0x1c] sm:$0xf]
        %v1342 = vld [vmem:[#allocation11 + $0x20] sm:$0xf]
        %v1343 = vld [vmem:[#allocation11 + $0x24] sm:$0xf]
        %v1344 = vld [vmem:[#allocation11 + $0x28] sm:$0xf]
        %v1345 = vld [vmem:[#allocation11 + $0x2c] sm:$0xf]
        %v1346 = vld [vmem:[#allocation11 + $0x30] sm:$0xf]
        %v1347 = vld [vmem:[#allocation11 + $0x34] sm:$0xf]
        %v1348 = vld [vmem:[#allocation11 + $0x38] sm:$0xf]
        %v1349 = vld [vmem:[#allocation11 + $0x3c] sm:$0xf]
        %v1350 = vld [vmem:[#allocation11 + $0x40] sm:$0xf]
        %v1351 = vld [vmem:[#allocation11 + $0x44] sm:$0xf]
        %v1352 = vld [vmem:[#allocation11 + $0x48] sm:$0xf]
        %v1353 = vld [vmem:[#allocation11 + $0x4c] sm:$0xf]
        %v1354 = vld [vmem:[#allocation11 + $0x50] sm:$0xf]
        %v1355 = vld [vmem:[#allocation11 + $0x54] sm:$0xf]
        %v1356 = vld [vmem:[#allocation11 + $0x58] sm:$0xf]
        %v1357 = vld [vmem:[#allocation11 + $0x5c] sm:$0xf]
        %v1358 = vld [vmem:[#allocation11 + $0x60] sm:$0xf]
        %v1359 = vld [vmem:[#allocation11 + $0x64] sm:$0xf]
        %v1360 = vld [vmem:[#allocation11 + $0x68] sm:$0xf]
        %v1361 = vld [vmem:[#allocation11 + $0x6c] sm:$0xf]
        %v1362 = vld [vmem:[#allocation11 + $0x70] sm:$0xf]
        %v1363 = vld [vmem:[#allocation11 + $0x74] sm:$0xf]
        %v1364 = vld [vmem:[#allocation11 + $0x78] sm:$0xf]
        %v1365 = vld [vmem:[#allocation11 + $0x7c] sm:$0xf]
        %v1366 = vld [vmem:[#allocation11 + $0x80] sm:$0xf]
        %v1367 = vld [vmem:[#allocation11 + $0x84] sm:$0xf]
        %v1368 = vld [vmem:[#allocation11 + $0x88] sm:$0xf]
        %v1369 = vld [vmem:[#allocation11 + $0x8c] sm:$0xf]
        %v1370 = vld [vmem:[#allocation11 + $0x90] sm:$0xf]
        %v1371 = vld [vmem:[#allocation11 + $0x94] sm:$0xf]
        %v1372 = vld [vmem:[#allocation11 + $0x98] sm:$0xf]
        %v1373 = vld [vmem:[#allocation11 + $0x9c] sm:$0xf]
        %v1374 = vld [vmem:[#allocation11 + $0xa0] sm:$0xf]
        %v1375 = vld [vmem:[#allocation11 + $0xa4] sm:$0xf]
        %v1376 = vld [vmem:[#allocation11 + $0xa8] sm:$0xf]
        %v1377 = vld [vmem:[#allocation11 + $0xac] sm:$0xf]
        %v1378 = vld [vmem:[#allocation11 + $0xb0] sm:$0xf]
        %v1379 = vld [vmem:[#allocation11 + $0xb4] sm:$0xf]
        %v1380 = vld [vmem:[#allocation11 + $0xb8] sm:$0xf]
        %v1381 = vld [vmem:[#allocation11 + $0xbc] sm:$0xf]
        %v1382 = vld [vmem:[#allocation11 + $0xc0] sm:$0xf]
        %v1383 = vld [vmem:[#allocation11 + $0xc4] sm:$0xf]
        %v1384 = vld [vmem:[#allocation11 + $0xc8] sm:$0xf]
        %v1385 = vld [vmem:[#allocation11 + $0xcc] sm:$0xf]
        %v1386 = vld [vmem:[#allocation11 + $0xd0] sm:$0xf]
        %v1387 = vld [vmem:[#allocation11 + $0xd4] sm:$0xf]
        %v1388 = vld [vmem:[#allocation11 + $0xd8] sm:$0xf]
        %v1389 = vld [vmem:[#allocation11 + $0xdc] sm:$0xf]
        %v1390 = vld [vmem:[#allocation11 + $0xe0] sm:$0xf]
        %v1391 = vld [vmem:[#allocation11 + $0xe4] sm:$0xf]
        %v1392 = vld [vmem:[#allocation11 + $0xe8] sm:$0xf]
        %v1393 = vld [vmem:[#allocation11 + $0xec] sm:$0xf]
        %v1394 = vld [vmem:[#allocation11 + $0xf0] sm:$0xf]
        %v1395 = vld [vmem:[#allocation11 + $0xf4] sm:$0xf]
        %v1396 = vld [vmem:[#allocation11 + $0xf8] sm:$0xf]
        %v1397 = vld [vmem:[#allocation11 + $0xfc] sm:$0xf]
        %1398 = vmatprep.subr.bf16.mxu0 0
        %1399 = vmatpush1.bf16.xpose.msra.mxu0 0
        %1400 = vmatprep.subr.bf16.mxu0 0
        %1401 = vmatpush1.bf16.xpose.msra.mxu0 0
        %1402 = vmatprep.subr.bf16.mxu0 0
        %1403 = vmatpush1.bf16.xpose.msra.mxu0 0
        %1404 = vmatprep.subr.bf16.mxu0 0
        %1405 = vmatpush1.bf16.xpose.msra.mxu0 0
        %1406 = vmatprep.subr.bf16.mxu0 0
        %1407 = vmatpush1.bf16.xpose.msra.mxu0 0
        %1408 = vmatprep.subr.bf16.mxu0 0
        %1409 = vmatpush1.bf16.xpose.msra.mxu0 0
        %1410 = vmatprep.subr.bf16.mxu0 0
        %1411 = vmatpush1.bf16.xpose.msra.mxu0 0
        %1412 = vmatprep.subr.bf16.mxu0 0
        %1413 = vmatpush1.bf16.xpose.msra.mxu0 %v1326
        %1414 = vmatprep.subr.bf16.mxu0 0
        %1415 = vmatpush2.bf16.xpose.msra.mxu0 0
        %1416 = vmatprep.subr.bf16.mxu0 0
        %1417 = vmatpush2.bf16.xpose.msra.mxu0 0
        %1418 = vmatprep.subr.bf16.mxu0 0
        %1419 = vmatpush2.bf16.xpose.msra.mxu0 0
        %1420 = vmatprep.subr.bf16.mxu0 0
        %1421 = vmatpush2.bf16.xpose.msra.mxu0 0
        %1422 = vmatprep.subr.bf16.mxu0 0
        %1423 = vmatpush2.bf16.xpose.msra.mxu0 0
        %1424 = vmatprep.subr.bf16.mxu0 0
        %1425 = vmatpush2.bf16.xpose.msra.mxu0 0
        %1426 = vmatprep.subr.bf16.mxu0 0
        %1427 = vmatpush2.bf16.xpose.msra.mxu0 0
        %1428 = vmatprep.subr.bf16.mxu0 0
        %1429 = vmatpush2.bf16.xpose.msra.mxu0 0
        %1430 = vmatprep.mubr.bf16.mxu0 0
        %1431 = vmatmul.mubr.bf16.gmra.mxu0 %v1322
        %v1432 = vpop.f32.mrf.mxu0
        %v1433 = vadd.f32 0.0, %v1432
        %v1434 = vpop.f32.mrf.mxu0
        %v1435 = vpop.f32.mrf.mxu0
        %v1436 = vpop.f32.mrf.mxu0
        %1437 = vdwg.mxu0
        %vm1438 = vcmask 64512
        %v1439 = vsel %vm1438, %v1433, -inf
        %1440 = vmax.xlane.f32.xlu0 %v1439
        %v1441 = vpop.xlane.xlu0 %1440
        %v1442 = vsub.f32 %v1433, %v1441
        %v1443 = vmul.f32 %v1442, 1.442695
        %v1444 = vpow.pop %v1443
        %v1445 = vsel %vm1438, %v1444, 0.0
        %1446 = vadd.xlane.f32.xlu0 %v1445
        %v1447 = vpop.xlane.xlu0 %1446
        %v1448 = vrcp.pop %v1447
        %v1449 = vmul.f32 %v1444, %v1448
        %v1450 = vpack.c.bf16 %v1449, %v1449
        %v1452 = vsel %vm1438, %v1450, 0
        %vm1454 = vcmask 1043456
        %v1456 = vsel %vm1454, %v1330, 0
        %1458 = vmatprep.subr.bf16.mxu0 0
        %1459 = vmatpush1.bf16.msra.mxu0 0
        %1460 = vmatprep.subr.bf16.mxu0 0
        %1461 = vmatpush1.bf16.msra.mxu0 0
        %1462 = vmatprep.subr.bf16.mxu0 0
        %1463 = vmatpush1.bf16.msra.mxu0 0
        %1464 = vmatprep.subr.bf16.mxu0 0
        %1465 = vmatpush1.bf16.msra.mxu0 0
        %1466 = vmatprep.subr.bf16.mxu0 0
        %1467 = vmatpush1.bf16.msra.mxu0 0
        %1468 = vmatprep.subr.bf16.mxu0 0
        %1469 = vmatpush1.bf16.msra.mxu0 0
        %1470 = vmatprep.subr.bf16.mxu0 0
        %1471 = vmatpush1.bf16.msra.mxu0 0
        %1472 = vmatprep.subr.bf16.mxu0 0
        %1473 = vmatpush1.bf16.msra.mxu0 %v1456
        %1474 = vmatprep.subr.bf16.mxu0 0
        %1475 = vmatpush2.bf16.msra.mxu0 0
        %1476 = vmatprep.subr.bf16.mxu0 0
        %1477 = vmatpush2.bf16.msra.mxu0 0
        %1478 = vmatprep.subr.bf16.mxu0 0
        %1479 = vmatpush2.bf16.msra.mxu0 0
        %1480 = vmatprep.subr.bf16.mxu0 0
        %1481 = vmatpush2.bf16.msra.mxu0 0
        %1482 = vmatprep.subr.bf16.mxu0 0
        %1483 = vmatpush2.bf16.msra.mxu0 0
        %1484 = vmatprep.subr.bf16.mxu0 0
        %1485 = vmatpush2.bf16.msra.mxu0 0
        %1486 = vmatprep.subr.bf16.mxu0 0
        %1487 = vmatpush2.bf16.msra.mxu0 0
        %1488 = vmatprep.subr.bf16.mxu0 0
        %1489 = vmatpush2.bf16.msra.mxu0 0
        %1490 = vmatprep.mubr.bf16.mxu0 0
        %1491 = vmatmul.mubr.bf16.gmra.mxu0 %v1452
        %v1492 = vpop.f32.mrf.mxu0
        %v1493 = vadd.f32 0.0, %v1492
        %v1494 = vpop.f32.mrf.mxu0
        %v1495 = vpop.f32.mrf.mxu0
        %v1496 = vpop.f32.mrf.mxu0
        %1497 = vdwg.mxu0
        %v1498 = vpack.c.bf16 %v1493, %v1493
        %1499 = vmatprep.subr.bf16.mxu0 0
        %1500 = vmatpush1.bf16.xpose.msra.mxu0 0
        %1501 = vmatprep.subr.bf16.mxu0 0
        %1502 = vmatpush1.bf16.xpose.msra.mxu0 0
        %1503 = vmatprep.subr.bf16.mxu0 0
        %1504 = vmatpush1.bf16.xpose.msra.mxu0 0
        %1505 = vmatprep.subr.bf16.mxu0 0
        %1506 = vmatpush1.bf16.xpose.msra.mxu0 0
        %1507 = vmatprep.subr.bf16.mxu0 0
        %1508 = vmatpush1.bf16.xpose.msra.mxu0 0
        %1509 = vmatprep.subr.bf16.mxu0 0
        %1510 = vmatpush1.bf16.xpose.msra.mxu0 0
        %1511 = vmatprep.subr.bf16.mxu0 0
        %1512 = vmatpush1.bf16.xpose.msra.mxu0 0
        %1513 = vmatprep.subr.bf16.mxu0 0
        %1514 = vmatpush1.bf16.xpose.msra.mxu0 %v1327
        %1515 = vmatprep.subr.bf16.mxu0 0
        %1516 = vmatpush2.bf16.xpose.msra.mxu0 0
        %1517 = vmatprep.subr.bf16.mxu0 0
        %1518 = vmatpush2.bf16.xpose.msra.mxu0 0
        %1519 = vmatprep.subr.bf16.mxu0 0
        %1520 = vmatpush2.bf16.xpose.msra.mxu0 0
        %1521 = vmatprep.subr.bf16.mxu0 0
        %1522 = vmatpush2.bf16.xpose.msra.mxu0 0
        %1523 = vmatprep.subr.bf16.mxu0 0
        %1524 = vmatpush2.bf16.xpose.msra.mxu0 0
        %1525 = vmatprep.subr.bf16.mxu0 0
        %1526 = vmatpush2.bf16.xpose.msra.mxu0 0
        %1527 = vmatprep.subr.bf16.mxu0 0
        %1528 = vmatpush2.bf16.xpose.msra.mxu0 0
        %1529 = vmatprep.subr.bf16.mxu0 0
        %1530 = vmatpush2.bf16.xpose.msra.mxu0 0
        %1531 = vmatprep.mubr.bf16.mxu0 0
        %1532 = vmatmul.mubr.bf16.gmra.mxu0 %v1323
        %v1533 = vpop.f32.mrf.mxu0
        %v1534 = vadd.f32 0.0, %v1533
        %v1535 = vpop.f32.mrf.mxu0
        %v1536 = vpop.f32.mrf.mxu0
        %v1537 = vpop.f32.mrf.mxu0
        %1538 = vdwg.mxu0
        %v1539 = vsel %vm1438, %v1534, -inf
        %1540 = vmax.xlane.f32.xlu0 %v1539
        %v1541 = vpop.xlane.xlu0 %1540
        %v1542 = vsub.f32 %v1534, %v1541
        %v1543 = vmul.f32 %v1542, 1.442695
        %v1544 = vpow.pop %v1543
        %v1545 = vsel %vm1438, %v1544, 0.0
        %1546 = vadd.xlane.f32.xlu0 %v1545
        %v1547 = vpop.xlane.xlu0 %1546
        %v1548 = vrcp.pop %v1547
        %v1549 = vmul.f32 %v1544, %v1548
        %v1550 = vpack.c.bf16 %v1549, %v1549
        %v1552 = vsel %vm1438, %v1550, 0
        %v1555 = vsel %vm1454, %v1331, 0
        %1557 = vmatprep.subr.bf16.mxu0 0
        %1558 = vmatpush1.bf16.msra.mxu0 0
        %1559 = vmatprep.subr.bf16.mxu0 0
        %1560 = vmatpush1.bf16.msra.mxu0 0
        %1561 = vmatprep.subr.bf16.mxu0 0
        %1562 = vmatpush1.bf16.msra.mxu0 0
        %1563 = vmatprep.subr.bf16.mxu0 0
        %1564 = vmatpush1.bf16.msra.mxu0 0
        %1565 = vmatprep.subr.bf16.mxu0 0
        %1566 = vmatpush1.bf16.msra.mxu0 0
        %1567 = vmatprep.subr.bf16.mxu0 0
        %1568 = vmatpush1.bf16.msra.mxu0 0
        %1569 = vmatprep.subr.bf16.mxu0 0
        %1570 = vmatpush1.bf16.msra.mxu0 0
        %1571 = vmatprep.subr.bf16.mxu0 0
        %1572 = vmatpush1.bf16.msra.mxu0 %v1555
        %1573 = vmatprep.subr.bf16.mxu0 0
        %1574 = vmatpush2.bf16.msra.mxu0 0
        %1575 = vmatprep.subr.bf16.mxu0 0
        %1576 = vmatpush2.bf16.msra.mxu0 0
        %1577 = vmatprep.subr.bf16.mxu0 0
        %1578 = vmatpush2.bf16.msra.mxu0 0
        %1579 = vmatprep.subr.bf16.mxu0 0
        %1580 = vmatpush2.bf16.msra.mxu0 0
        %1581 = vmatprep.subr.bf16.mxu0 0
        %1582 = vmatpush2.bf16.msra.mxu0 0
        %1583 = vmatprep.subr.bf16.mxu0 0
        %1584 = vmatpush2.bf16.msra.mxu0 0
        %1585 = vmatprep.subr.bf16.mxu0 0
        %1586 = vmatpush2.bf16.msra.mxu0 0
        %1587 = vmatprep.subr.bf16.mxu0 0
        %1588 = vmatpush2.bf16.msra.mxu0 0
        %1589 = vmatprep.mubr.bf16.mxu0 0
        %1590 = vmatmul.mubr.bf16.gmra.mxu0 %v1552
        %v1591 = vpop.f32.mrf.mxu0
        %v1592 = vadd.f32 0.0, %v1591
        %v1593 = vpop.f32.mrf.mxu0
        %v1594 = vpop.f32.mrf.mxu0
        %v1595 = vpop.f32.mrf.mxu0
        %1596 = vdwg.mxu0
        %v1597 = vpack.c.bf16 %v1592, %v1592
        %v1614 = vunpack.c.l.b16 %v1350
        %v1615 = vunpack.c.l.b16 %v1351
        %v1616 = vunpack.c.l.b16 %v1352
        %v1617 = vunpack.c.l.b16 %v1353
        %v1618 = vunpack.c.l.b16 %v1354
        %v1619 = vunpack.c.l.b16 %v1355
        %v1620 = vunpack.c.l.b16 %v1356
        %v1621 = vunpack.c.l.b16 %v1357
        %v1622 = vunpack.c.l.b16 %v1358
        %v1623 = vunpack.c.l.b16 %v1359
        %v1624 = vunpack.c.l.b16 %v1360
        %v1625 = vunpack.c.l.b16 %v1361
        %v1626 = vunpack.c.l.b16 %v1362
        %v1627 = vunpack.c.l.b16 %v1363
        %v1628 = vunpack.c.l.b16 %v1364
        %v1629 = vunpack.c.l.b16 %v1365
        %v1630 = vpack.c.b16 %v1615, %v1614
        %v1631 = vpack.c.b16 %v1617, %v1616
        %v1632 = vpack.c.b16 %v1619, %v1618
        %v1633 = vpack.c.b16 %v1621, %v1620
        %v1634 = vpack.c.b16 %v1623, %v1622
        %v1635 = vpack.c.b16 %v1625, %v1624
        %v1636 = vpack.c.b16 %v1627, %v1626
        %v1637 = vpack.c.b16 %v1629, %v1628
        %1646 = vmatprep.subr.bf16.mxu0 0
        %1647 = vmatpush1.bf16.msra.mxu0 %v1637
        %1648 = vmatprep.subr.bf16.mxu0 0
        %1649 = vmatpush1.bf16.msra.mxu0 %v1636
        %1650 = vmatprep.subr.bf16.mxu0 0
        %1651 = vmatpush1.bf16.msra.mxu0 %v1635
        %1652 = vmatprep.subr.bf16.mxu0 0
        %1653 = vmatpush1.bf16.msra.mxu0 %v1634
        %1654 = vmatprep.subr.bf16.mxu0 0
        %1655 = vmatpush1.bf16.msra.mxu0 %v1633
        %1656 = vmatprep.subr.bf16.mxu0 0
        %1657 = vmatpush1.bf16.msra.mxu0 %v1632
        %1658 = vmatprep.subr.bf16.mxu0 0
        %1659 = vmatpush1.bf16.msra.mxu0 %v1631
        %1660 = vmatprep.subr.bf16.mxu0 0
        %1661 = vmatpush1.bf16.msra.mxu0 %v1630
        %1662 = vmatprep.subr.bf16.mxu0 0
        %1663 = vmatpush2.bf16.msra.mxu0 0
        %1664 = vmatprep.subr.bf16.mxu0 0
        %1665 = vmatpush2.bf16.msra.mxu0 0
        %1666 = vmatprep.subr.bf16.mxu0 0
        %1667 = vmatpush2.bf16.msra.mxu0 0
        %1668 = vmatprep.subr.bf16.mxu0 0
        %1669 = vmatpush2.bf16.msra.mxu0 0
        %1670 = vmatprep.subr.bf16.mxu0 0
        %1671 = vmatpush2.bf16.msra.mxu0 0
        %1672 = vmatprep.subr.bf16.mxu0 0
        %1673 = vmatpush2.bf16.msra.mxu0 0
        %1674 = vmatprep.subr.bf16.mxu0 0
        %1675 = vmatpush2.bf16.msra.mxu0 0
        %1676 = vmatprep.subr.bf16.mxu0 0
        %1677 = vmatpush2.bf16.msra.mxu0 0
        %1678 = vmatprep.mubr.bf16.mxu0 0
        %1679 = vmatmul.mubr.bf16.gmra.mxu0 %v1597
        %v1680 = vpop.f32.mrf.mxu0
        %v1681 = vadd.f32 0.0, %v1680
        %v1682 = vpop.f32.mrf.mxu0
        %v1683 = vpop.f32.mrf.mxu0
        %v1684 = vpop.f32.mrf.mxu0
        %1685 = vdwg.mxu0
        %v1702 = vunpack.c.l.b16 %v1334
        %v1703 = vunpack.c.l.b16 %v1335
        %v1704 = vunpack.c.l.b16 %v1336
        %v1705 = vunpack.c.l.b16 %v1337
        %v1706 = vunpack.c.l.b16 %v1338
        %v1707 = vunpack.c.l.b16 %v1339
        %v1708 = vunpack.c.l.b16 %v1340
        %v1709 = vunpack.c.l.b16 %v1341
        %v1710 = vunpack.c.l.b16 %v1342
        %v1711 = vunpack.c.l.b16 %v1343
        %v1712 = vunpack.c.l.b16 %v1344
        %v1713 = vunpack.c.l.b16 %v1345
        %v1714 = vunpack.c.l.b16 %v1346
        %v1715 = vunpack.c.l.b16 %v1347
        %v1716 = vunpack.c.l.b16 %v1348
        %v1717 = vunpack.c.l.b16 %v1349
        %v1718 = vpack.c.b16 %v1703, %v1702
        %v1719 = vpack.c.b16 %v1705, %v1704
        %v1720 = vpack.c.b16 %v1707, %v1706
        %v1721 = vpack.c.b16 %v1709, %v1708
        %v1722 = vpack.c.b16 %v1711, %v1710
        %v1723 = vpack.c.b16 %v1713, %v1712
        %v1724 = vpack.c.b16 %v1715, %v1714
        %v1725 = vpack.c.b16 %v1717, %v1716
        %1734 = vmatprep.subr.bf16.mxu0 0
        %1735 = vmatpush1.bf16.msra.mxu0 %v1725
        %1736 = vmatprep.subr.bf16.mxu0 0
        %1737 = vmatpush1.bf16.msra.mxu0 %v1724
        %1738 = vmatprep.subr.bf16.mxu0 0
        %1739 = vmatpush1.bf16.msra.mxu0 %v1723
        %1740 = vmatprep.subr.bf16.mxu0 0
        %1741 = vmatpush1.bf16.msra.mxu0 %v1722
        %1742 = vmatprep.subr.bf16.mxu0 0
        %1743 = vmatpush1.bf16.msra.mxu0 %v1721
        %1744 = vmatprep.subr.bf16.mxu0 0
        %1745 = vmatpush1.bf16.msra.mxu0 %v1720
        %1746 = vmatprep.subr.bf16.mxu0 0
        %1747 = vmatpush1.bf16.msra.mxu0 %v1719
        %1748 = vmatprep.subr.bf16.mxu0 0
        %1749 = vmatpush1.bf16.msra.mxu0 %v1718
        %1750 = vmatprep.subr.bf16.mxu0 0
        %1751 = vmatpush2.bf16.msra.mxu0 0
        %1752 = vmatprep.subr.bf16.mxu0 0
        %1753 = vmatpush2.bf16.msra.mxu0 0
        %1754 = vmatprep.subr.bf16.mxu0 0
        %1755 = vmatpush2.bf16.msra.mxu0 0
        %1756 = vmatprep.subr.bf16.mxu0 0
        %1757 = vmatpush2.bf16.msra.mxu0 0
        %1758 = vmatprep.subr.bf16.mxu0 0
        %1759 = vmatpush2.bf16.msra.mxu0 0
        %1760 = vmatprep.subr.bf16.mxu0 0
        %1761 = vmatpush2.bf16.msra.mxu0 0
        %1762 = vmatprep.subr.bf16.mxu0 0
        %1763 = vmatpush2.bf16.msra.mxu0 0
        %1764 = vmatprep.subr.bf16.mxu0 0
        %1765 = vmatpush2.bf16.msra.mxu0 0
        %1766 = vmatprep.mubr.bf16.mxu0 0
        %1767 = vmatmul.mubr.bf16.gmra.mxu0 %v1498
        %v1768 = vpop.f32.mrf.mxu0
        %v1769 = vadd.f32 %v1681, %v1768
        %v1770 = vpop.f32.mrf.mxu0
        %v1771 = vpop.f32.mrf.mxu0
        %v1772 = vpop.f32.mrf.mxu0
        %1773 = vdwg.mxu0
        %1774 = vmatprep.subr.bf16.mxu0 0
        %1775 = vmatpush1.bf16.xpose.msra.mxu0 0
        %1776 = vmatprep.subr.bf16.mxu0 0
        %1777 = vmatpush1.bf16.xpose.msra.mxu0 0
        %1778 = vmatprep.subr.bf16.mxu0 0
        %1779 = vmatpush1.bf16.xpose.msra.mxu0 0
        %1780 = vmatprep.subr.bf16.mxu0 0
        %1781 = vmatpush1.bf16.xpose.msra.mxu0 0
        %1782 = vmatprep.subr.bf16.mxu0 0
        %1783 = vmatpush1.bf16.xpose.msra.mxu0 0
        %1784 = vmatprep.subr.bf16.mxu0 0
        %1785 = vmatpush1.bf16.xpose.msra.mxu0 0
        %1786 = vmatprep.subr.bf16.mxu0 0
        %1787 = vmatpush1.bf16.xpose.msra.mxu0 0
        %1788 = vmatprep.subr.bf16.mxu0 0
        %1789 = vmatpush1.bf16.xpose.msra.mxu0 %v1328
        %1790 = vmatprep.subr.bf16.mxu0 0
        %1791 = vmatpush2.bf16.xpose.msra.mxu0 0
        %1792 = vmatprep.subr.bf16.mxu0 0
        %1793 = vmatpush2.bf16.xpose.msra.mxu0 0
        %1794 = vmatprep.subr.bf16.mxu0 0
        %1795 = vmatpush2.bf16.xpose.msra.mxu0 0
        %1796 = vmatprep.subr.bf16.mxu0 0
        %1797 = vmatpush2.bf16.xpose.msra.mxu0 0
        %1798 = vmatprep.subr.bf16.mxu0 0
        %1799 = vmatpush2.bf16.xpose.msra.mxu0 0
        %1800 = vmatprep.subr.bf16.mxu0 0
        %1801 = vmatpush2.bf16.xpose.msra.mxu0 0
        %1802 = vmatprep.subr.bf16.mxu0 0
        %1803 = vmatpush2.bf16.xpose.msra.mxu0 0
        %1804 = vmatprep.subr.bf16.mxu0 0
        %1805 = vmatpush2.bf16.xpose.msra.mxu0 0
        %1806 = vmatprep.mubr.bf16.mxu0 0
        %1807 = vmatmul.mubr.bf16.gmra.mxu0 %v1324
        %v1808 = vpop.f32.mrf.mxu0
        %v1809 = vadd.f32 0.0, %v1808
        %v1810 = vpop.f32.mrf.mxu0
        %v1811 = vpop.f32.mrf.mxu0
        %v1812 = vpop.f32.mrf.mxu0
        %1813 = vdwg.mxu0
        %v1814 = vsel %vm1438, %v1809, -inf
        %1815 = vmax.xlane.f32.xlu0 %v1814
        %v1816 = vpop.xlane.xlu0 %1815
        %v1817 = vsub.f32 %v1809, %v1816
        %v1818 = vmul.f32 %v1817, 1.442695
        %v1819 = vpow.pop %v1818
        %v1820 = vsel %vm1438, %v1819, 0.0
        %1821 = vadd.xlane.f32.xlu0 %v1820
        %v1822 = vpop.xlane.xlu0 %1821
        %v1823 = vrcp.pop %v1822
        %v1824 = vmul.f32 %v1819, %v1823
        %v1825 = vpack.c.bf16 %v1824, %v1824
        %v1827 = vsel %vm1438, %v1825, 0
        %v1830 = vsel %vm1454, %v1332, 0
        %1832 = vmatprep.subr.bf16.mxu0 0
        %1833 = vmatpush1.bf16.msra.mxu0 0
        %1834 = vmatprep.subr.bf16.mxu0 0
        %1835 = vmatpush1.bf16.msra.mxu0 0
        %1836 = vmatprep.subr.bf16.mxu0 0
        %1837 = vmatpush1.bf16.msra.mxu0 0
        %1838 = vmatprep.subr.bf16.mxu0 0
        %1839 = vmatpush1.bf16.msra.mxu0 0
        %1840 = vmatprep.subr.bf16.mxu0 0
        %1841 = vmatpush1.bf16.msra.mxu0 0
        %1842 = vmatprep.subr.bf16.mxu0 0
        %1843 = vmatpush1.bf16.msra.mxu0 0
        %1844 = vmatprep.subr.bf16.mxu0 0
        %1845 = vmatpush1.bf16.msra.mxu0 0
        %1846 = vmatprep.subr.bf16.mxu0 0
        %1847 = vmatpush1.bf16.msra.mxu0 %v1830
        %1848 = vmatprep.subr.bf16.mxu0 0
        %1849 = vmatpush2.bf16.msra.mxu0 0
        %1850 = vmatprep.subr.bf16.mxu0 0
        %1851 = vmatpush2.bf16.msra.mxu0 0
        %1852 = vmatprep.subr.bf16.mxu0 0
        %1853 = vmatpush2.bf16.msra.mxu0 0
        %1854 = vmatprep.subr.bf16.mxu0 0
        %1855 = vmatpush2.bf16.msra.mxu0 0
        %1856 = vmatprep.subr.bf16.mxu0 0
        %1857 = vmatpush2.bf16.msra.mxu0 0
        %1858 = vmatprep.subr.bf16.mxu0 0
        %1859 = vmatpush2.bf16.msra.mxu0 0
        %1860 = vmatprep.subr.bf16.mxu0 0
        %1861 = vmatpush2.bf16.msra.mxu0 0
        %1862 = vmatprep.subr.bf16.mxu0 0
        %1863 = vmatpush2.bf16.msra.mxu0 0
        %1864 = vmatprep.mubr.bf16.mxu0 0
        %1865 = vmatmul.mubr.bf16.gmra.mxu0 %v1827
        %v1866 = vpop.f32.mrf.mxu0
        %v1867 = vadd.f32 0.0, %v1866
        %v1868 = vpop.f32.mrf.mxu0
        %v1869 = vpop.f32.mrf.mxu0
        %v1870 = vpop.f32.mrf.mxu0
        %1871 = vdwg.mxu0
        %v1872 = vpack.c.bf16 %v1867, %v1867
        %v1889 = vunpack.c.l.b16 %v1366
        %v1890 = vunpack.c.l.b16 %v1367
        %v1891 = vunpack.c.l.b16 %v1368
        %v1892 = vunpack.c.l.b16 %v1369
        %v1893 = vunpack.c.l.b16 %v1370
        %v1894 = vunpack.c.l.b16 %v1371
        %v1895 = vunpack.c.l.b16 %v1372
        %v1896 = vunpack.c.l.b16 %v1373
        %v1897 = vunpack.c.l.b16 %v1374
        %v1898 = vunpack.c.l.b16 %v1375
        %v1899 = vunpack.c.l.b16 %v1376
        %v1900 = vunpack.c.l.b16 %v1377
        %v1901 = vunpack.c.l.b16 %v1378
        %v1902 = vunpack.c.l.b16 %v1379
        %v1903 = vunpack.c.l.b16 %v1380
        %v1904 = vunpack.c.l.b16 %v1381
        %v1905 = vpack.c.b16 %v1890, %v1889
        %v1906 = vpack.c.b16 %v1892, %v1891
        %v1907 = vpack.c.b16 %v1894, %v1893
        %v1908 = vpack.c.b16 %v1896, %v1895
        %v1909 = vpack.c.b16 %v1898, %v1897
        %v1910 = vpack.c.b16 %v1900, %v1899
        %v1911 = vpack.c.b16 %v1902, %v1901
        %v1912 = vpack.c.b16 %v1904, %v1903
        %1921 = vmatprep.subr.bf16.mxu0 0
        %1922 = vmatpush1.bf16.msra.mxu0 %v1912
        %1923 = vmatprep.subr.bf16.mxu0 0
        %1924 = vmatpush1.bf16.msra.mxu0 %v1911
        %1925 = vmatprep.subr.bf16.mxu0 0
        %1926 = vmatpush1.bf16.msra.mxu0 %v1910
        %1927 = vmatprep.subr.bf16.mxu0 0
        %1928 = vmatpush1.bf16.msra.mxu0 %v1909
        %1929 = vmatprep.subr.bf16.mxu0 0
        %1930 = vmatpush1.bf16.msra.mxu0 %v1908
        %1931 = vmatprep.subr.bf16.mxu0 0
        %1932 = vmatpush1.bf16.msra.mxu0 %v1907
        %1933 = vmatprep.subr.bf16.mxu0 0
        %1934 = vmatpush1.bf16.msra.mxu0 %v1906
        %1935 = vmatprep.subr.bf16.mxu0 0
        %1936 = vmatpush1.bf16.msra.mxu0 %v1905
        %1937 = vmatprep.subr.bf16.mxu0 0
        %1938 = vmatpush2.bf16.msra.mxu0 0
        %1939 = vmatprep.subr.bf16.mxu0 0
        %1940 = vmatpush2.bf16.msra.mxu0 0
        %1941 = vmatprep.subr.bf16.mxu0 0
        %1942 = vmatpush2.bf16.msra.mxu0 0
        %1943 = vmatprep.subr.bf16.mxu0 0
        %1944 = vmatpush2.bf16.msra.mxu0 0
        %1945 = vmatprep.subr.bf16.mxu0 0
        %1946 = vmatpush2.bf16.msra.mxu0 0
        %1947 = vmatprep.subr.bf16.mxu0 0
        %1948 = vmatpush2.bf16.msra.mxu0 0
        %1949 = vmatprep.subr.bf16.mxu0 0
        %1950 = vmatpush2.bf16.msra.mxu0 0
        %1951 = vmatprep.subr.bf16.mxu0 0
        %1952 = vmatpush2.bf16.msra.mxu0 0
        %1953 = vmatprep.mubr.bf16.mxu0 0
        %1954 = vmatmul.mubr.bf16.gmra.mxu0 %v1872
        %v1955 = vpop.f32.mrf.mxu0
        %v1956 = vadd.f32 0.0, %v1955
        %v1957 = vpop.f32.mrf.mxu0
        %v1958 = vpop.f32.mrf.mxu0
        %v1959 = vpop.f32.mrf.mxu0
        %1960 = vdwg.mxu0
        %v1961 = vadd.f32 %v1769, %v1956
        %1962 = vmatprep.subr.bf16.mxu0 0
        %1963 = vmatpush1.bf16.xpose.msra.mxu0 0
        %1964 = vmatprep.subr.bf16.mxu0 0
        %1965 = vmatpush1.bf16.xpose.msra.mxu0 0
        %1966 = vmatprep.subr.bf16.mxu0 0
        %1967 = vmatpush1.bf16.xpose.msra.mxu0 0
        %1968 = vmatprep.subr.bf16.mxu0 0
        %1969 = vmatpush1.bf16.xpose.msra.mxu0 0
        %1970 = vmatprep.subr.bf16.mxu0 0
        %1971 = vmatpush1.bf16.xpose.msra.mxu0 0
        %1972 = vmatprep.subr.bf16.mxu0 0
        %1973 = vmatpush1.bf16.xpose.msra.mxu0 0
        %1974 = vmatprep.subr.bf16.mxu0 0
        %1975 = vmatpush1.bf16.xpose.msra.mxu0 0
        %1976 = vmatprep.subr.bf16.mxu0 0
        %1977 = vmatpush1.bf16.xpose.msra.mxu0 %v1329
        %1978 = vmatprep.subr.bf16.mxu0 0
        %1979 = vmatpush2.bf16.xpose.msra.mxu0 0
        %1980 = vmatprep.subr.bf16.mxu0 0
        %1981 = vmatpush2.bf16.xpose.msra.mxu0 0
        %1982 = vmatprep.subr.bf16.mxu0 0
        %1983 = vmatpush2.bf16.xpose.msra.mxu0 0
        %1984 = vmatprep.subr.bf16.mxu0 0
        %1985 = vmatpush2.bf16.xpose.msra.mxu0 0
        %1986 = vmatprep.subr.bf16.mxu0 0
        %1987 = vmatpush2.bf16.xpose.msra.mxu0 0
        %1988 = vmatprep.subr.bf16.mxu0 0
        %1989 = vmatpush2.bf16.xpose.msra.mxu0 0
        %1990 = vmatprep.subr.bf16.mxu0 0
        %1991 = vmatpush2.bf16.xpose.msra.mxu0 0
        %1992 = vmatprep.subr.bf16.mxu0 0
        %1993 = vmatpush2.bf16.xpose.msra.mxu0 0
        %1994 = vmatprep.mubr.bf16.mxu0 0
        %1995 = vmatmul.mubr.bf16.gmra.mxu0 %v1325
        %v1996 = vpop.f32.mrf.mxu0
        %v1997 = vadd.f32 0.0, %v1996
        %v1998 = vpop.f32.mrf.mxu0
        %v1999 = vpop.f32.mrf.mxu0
        %v2000 = vpop.f32.mrf.mxu0
        %2001 = vdwg.mxu0
        %v2002 = vsel %vm1438, %v1997, -inf
        %2003 = vmax.xlane.f32.xlu0 %v2002
        %v2004 = vpop.xlane.xlu0 %2003
        %v2005 = vsub.f32 %v1997, %v2004
        %v2006 = vmul.f32 %v2005, 1.442695
        %v2007 = vpow.pop %v2006
        %v2008 = vsel %vm1438, %v2007, 0.0
        %2009 = vadd.xlane.f32.xlu0 %v2008
        %v2010 = vpop.xlane.xlu0 %2009
        %v2011 = vrcp.pop %v2010
        %v2012 = vmul.f32 %v2007, %v2011
        %v2013 = vpack.c.bf16 %v2012, %v2012
        %v2015 = vsel %vm1438, %v2013, 0
        %v2018 = vsel %vm1454, %v1333, 0
        %2020 = vmatprep.subr.bf16.mxu0 0
        %2021 = vmatpush1.bf16.msra.mxu0 0
        %2022 = vmatprep.subr.bf16.mxu0 0
        %2023 = vmatpush1.bf16.msra.mxu0 0
        %2024 = vmatprep.subr.bf16.mxu0 0
        %2025 = vmatpush1.bf16.msra.mxu0 0
        %2026 = vmatprep.subr.bf16.mxu0 0
        %2027 = vmatpush1.bf16.msra.mxu0 0
        %2028 = vmatprep.subr.bf16.mxu0 0
        %2029 = vmatpush1.bf16.msra.mxu0 0
        %2030 = vmatprep.subr.bf16.mxu0 0
        %2031 = vmatpush1.bf16.msra.mxu0 0
        %2032 = vmatprep.subr.bf16.mxu0 0
        %2033 = vmatpush1.bf16.msra.mxu0 0
        %2034 = vmatprep.subr.bf16.mxu0 0
        %2035 = vmatpush1.bf16.msra.mxu0 %v2018
        %2036 = vmatprep.subr.bf16.mxu0 0
        %2037 = vmatpush2.bf16.msra.mxu0 0
        %2038 = vmatprep.subr.bf16.mxu0 0
        %2039 = vmatpush2.bf16.msra.mxu0 0
        %2040 = vmatprep.subr.bf16.mxu0 0
        %2041 = vmatpush2.bf16.msra.mxu0 0
        %2042 = vmatprep.subr.bf16.mxu0 0
        %2043 = vmatpush2.bf16.msra.mxu0 0
        %2044 = vmatprep.subr.bf16.mxu0 0
        %2045 = vmatpush2.bf16.msra.mxu0 0
        %2046 = vmatprep.subr.bf16.mxu0 0
        %2047 = vmatpush2.bf16.msra.mxu0 0
        %2048 = vmatprep.subr.bf16.mxu0 0
        %2049 = vmatpush2.bf16.msra.mxu0 0
        %2050 = vmatprep.subr.bf16.mxu0 0
        %2051 = vmatpush2.bf16.msra.mxu0 0
        %2052 = vmatprep.mubr.bf16.mxu0 0
        %2053 = vmatmul.mubr.bf16.gmra.mxu0 %v2015
        %v2054 = vpop.f32.mrf.mxu0
        %v2055 = vadd.f32 0.0, %v2054
        %v2056 = vpop.f32.mrf.mxu0
        %v2057 = vpop.f32.mrf.mxu0
        %v2058 = vpop.f32.mrf.mxu0
        %2059 = vdwg.mxu0
        %v2060 = vpack.c.bf16 %v2055, %v2055
        %v2077 = vunpack.c.l.b16 %v1382
        %v2078 = vunpack.c.l.b16 %v1383
        %v2079 = vunpack.c.l.b16 %v1384
        %v2080 = vunpack.c.l.b16 %v1385
        %v2081 = vunpack.c.l.b16 %v1386
        %v2082 = vunpack.c.l.b16 %v1387
        %v2083 = vunpack.c.l.b16 %v1388
        %v2084 = vunpack.c.l.b16 %v1389
        %v2085 = vunpack.c.l.b16 %v1390
        %v2086 = vunpack.c.l.b16 %v1391
        %v2087 = vunpack.c.l.b16 %v1392
        %v2088 = vunpack.c.l.b16 %v1393
        %v2089 = vunpack.c.l.b16 %v1394
        %v2090 = vunpack.c.l.b16 %v1395
        %v2091 = vunpack.c.l.b16 %v1396
        %v2092 = vunpack.c.l.b16 %v1397
        %v2093 = vpack.c.b16 %v2078, %v2077
        %v2094 = vpack.c.b16 %v2080, %v2079
        %v2095 = vpack.c.b16 %v2082, %v2081
        %v2096 = vpack.c.b16 %v2084, %v2083
        %v2097 = vpack.c.b16 %v2086, %v2085
        %v2098 = vpack.c.b16 %v2088, %v2087
        %v2099 = vpack.c.b16 %v2090, %v2089
        %v2100 = vpack.c.b16 %v2092, %v2091
        %2109 = vmatprep.subr.bf16.mxu0 0
        %2110 = vmatpush1.bf16.msra.mxu0 %v2100
        %2111 = vmatprep.subr.bf16.mxu0 0
        %2112 = vmatpush1.bf16.msra.mxu0 %v2099
        %2113 = vmatprep.subr.bf16.mxu0 0
        %2114 = vmatpush1.bf16.msra.mxu0 %v2098
        %2115 = vmatprep.subr.bf16.mxu0 0
        %2116 = vmatpush1.bf16.msra.mxu0 %v2097
        %2117 = vmatprep.subr.bf16.mxu0 0
        %2118 = vmatpush1.bf16.msra.mxu0 %v2096
        %2119 = vmatprep.subr.bf16.mxu0 0
        %2120 = vmatpush1.bf16.msra.mxu0 %v2095
        %2121 = vmatprep.subr.bf16.mxu0 0
        %2122 = vmatpush1.bf16.msra.mxu0 %v2094
        %2123 = vmatprep.subr.bf16.mxu0 0
        %2124 = vmatpush1.bf16.msra.mxu0 %v2093
        %2125 = vmatprep.subr.bf16.mxu0 0
        %2126 = vmatpush2.bf16.msra.mxu0 0
        %2127 = vmatprep.subr.bf16.mxu0 0
        %2128 = vmatpush2.bf16.msra.mxu0 0
        %2129 = vmatprep.subr.bf16.mxu0 0
        %2130 = vmatpush2.bf16.msra.mxu0 0
        %2131 = vmatprep.subr.bf16.mxu0 0
        %2132 = vmatpush2.bf16.msra.mxu0 0
        %2133 = vmatprep.subr.bf16.mxu0 0
        %2134 = vmatpush2.bf16.msra.mxu0 0
        %2135 = vmatprep.subr.bf16.mxu0 0
        %2136 = vmatpush2.bf16.msra.mxu0 0
        %2137 = vmatprep.subr.bf16.mxu0 0
        %2138 = vmatpush2.bf16.msra.mxu0 0
        %2139 = vmatprep.subr.bf16.mxu0 0
        %2140 = vmatpush2.bf16.msra.mxu0 0
        %2141 = vmatprep.mubr.bf16.mxu0 0
        %2142 = vmatmul.mubr.bf16.gmra.mxu0 %v2060
        %v2143 = vpop.f32.mrf.mxu0
        %v2144 = vadd.f32 0.0, %v2143
        %v2145 = vpop.f32.mrf.mxu0
        %v2146 = vpop.f32.mrf.mxu0
        %v2147 = vpop.f32.mrf.mxu0
        %2148 = vdwg.mxu0
        %v2149 = vadd.f32 %v1961, %v2144
        %v2150 = vld [vmem:[%s7] sm:$0x1]
        %v2152 = vlaneseq
        %v2153 = vshrl.u32 %v2152, 7
        %v2154 = vsub.s32 0, %v2153
        %v2155 = vrot.slane %v2150, %v2154
        %v2157 = vadd.f32 %v2149, %v2155
        %2158 = vst [vmem:[%s430] sm:$0xff] %v2157
        %s2159 = sand.u32 %s232, 1
        %s2160 = scalar_lea.sflag [#allocation4], %s2159
        %s2161 = sand.u32 %s232, 1
        %s2162 = smul.addr %s2161, 8
        %s2163 = scalar_lea.vmem [#allocation13], %s2162
        // Predicated region
        $region77: #{tpu_custom_call.1} parent=51 // pred_check
          %p2164 = pneg %p242
        $region78: #{tpu_custom_call.1} parent=51 // pred_check_branch
          %2166 = sbr.rel (%p2164) target = $region80
        $region79: #{tpu_custom_call.1} parent=51 // pred_region
          %s2168 = ssub.s32 128, 128
          %2169 = vsyncadd %s2160, %s2168
          %s2170 = sadd.s32 %s35, %s34
          %s2171 = smul.addr %s2170, 128
          %s2172 = scalar_lea.hbm %s8, %s2171
          %s2174 = sshll.u32 %s2163, 4
          %s2175 = int_to_ptr.vmem [resolvable:$true] %s2174
          %2177 = dma.vmem_to_hbm [thread:$0]  %s2175, 128, %s2172, %s2160
        $region80: #{tpu_custom_call.1} parent=51 // pred_fallthru
          _
      $region52: #{tpu_custom_call.1} parent=5 // pred_fallthru
        _
      %p2178 = scmp.le.s32.totalorder 2, %s25
      // Predicated region
      $region81: #{tpu_custom_call.1} parent=5 // pred_check
        %p2179 = pneg %p2178
      $region82: #{tpu_custom_call.1} parent=5 // pred_check_branch
        %2181 = sbr.rel (%p2179) target = $region84
      $region83: #{tpu_custom_call.1} parent=5 // pred_region
        %s2182 = ssub.s32 %s25, 2
        // Predicated region
        $region85: #{tpu_custom_call.1} parent=83 // pred_check
          %p2183 = pneg %p248
        $region86: #{tpu_custom_call.1} parent=83 // pred_check_branch
          %2185 = sbr.rel (%p2183) target = $region88
        $region87: #{tpu_custom_call.1} parent=83 // pred_region
          %s2186 = sand.u32 %s233, 1
          %s2187 = scalar_lea.sflag [#allocation4], %s2186
          %s2188 = sand.u32 %s233, 1
          %s2189 = smul.addr %s2188, 8
          %s2190 = scalar_lea.vmem [#allocation13], %s2189
          %2191 = dma.done %s2187, 128
        $region88: #{tpu_custom_call.1} parent=83 // pred_fallthru
          _
      $region84: #{tpu_custom_call.1} parent=5 // pred_fallthru
        _
    $region6: #{tpu_custom_call.1} parent=1 // loop_footer
      %s29 = sadd.s32 1, %s25
    $region7: #{tpu_custom_call.1} parent=1 // loop_footer_branch
      %24 = sbr.rel target = $region3
    $region8: #{tpu_custom_call.1} parent=1 // loop_exit
      _
    %2192 = vsyncpa [#allocation3], 1
    %s2193 = scalar_lea.sflag [#allocation3], 1
    %2194 = vsyncpa %s2193, 1
    %2195 = vsyncpa [#allocation6], 1
    %s2196 = scalar_lea.sflag [#allocation6], 1
    %2197 = vsyncpa %s2196, 1
    %2198 = vsyncpa [#allocation9], 1
    %2199 = vsyncpa [#allocation12], 1
    %2200 = vsyncpa [#allocation4], 1
    %s2201 = scalar_lea.sflag [#allocation4], 1
    %2202 = vsyncpa %s2201, 1

</llo_original>
